<compile_context>
chip_gen: v7x
topology: tpu7x:2x2x1
jax: 0.10.0
libtpu: 0.0.40
codegen_flags: <defaults>
</compile_context>

<pallas_src>
import functools
import math

import jax
import jax.numpy as jnp
import numpy as np
from jax import lax
from jax.experimental import pallas as pl
from jax.experimental.pallas import tpu as pltpu

BETA = 1.0
ALPHA = 2.0

_INF_BITS = 0x7F800000   # +inf bit pattern: strict upper bound for finite bg loss
_VAL_ITERS = 17          # 4-way search shrinks the span 4x per iter; 16 suffices (+1 margin)


def _multibox_loss_kernel(conf_ref, loc_ref, gt_ref, labels_ref, out_ref, *,
                          neg_pos_ratio, a_const, c_const, n_valid, idx_iters):
    conf = conf_ref[...].astype(jnp.float32)      # (C, Bb, N)
    pred = loc_ref[...].astype(jnp.float32)       # (4, Bb, N)
    gt = gt_ref[...].astype(jnp.float32)          # (4, Bb, N)
    labels = labels_ref[...]                      # (Bb, N) int32

    C, Bb, N = conf.shape

    lane_idx = lax.broadcasted_iota(jnp.int32, (Bb, N), 1)
    if n_valid < N:                               # static: mask padded lanes exactly once
        valid = lane_idx < n_valid
        pos = (labels > 0) & valid
        neg = jnp.logical_not(labels > 0) & valid
    else:
        pos = labels > 0
        neg = jnp.logical_not(pos)
    pos_f = pos.astype(jnp.float32)

    # ---- log-sum-exp over classes: reductions over the leading (untiled) axis,
    # so every intermediate stays a dense (Bb, N) tile (batch on sublanes).
    m = jnp.max(conf, axis=0)                                         # (Bb, N)
    lse = jnp.log(jnp.sum(jnp.exp(conf - m[None]), axis=0))           # (Bb, N)
    logz = m + lse                                                    # (Bb, N)

    # -log_softmax[..., 0]  (>= 0 mathematically; clamp guards rounding and
    # keeps the int32 bit pattern monotone for the threshold search).
    bg_loss = jnp.maximum(logz - conf[0], 0.0)                        # (Bb, N)

    # cross entropy per prior: logZ - logit[label] (one-hot over leading axis)
    cls_iota = lax.broadcasted_iota(jnp.int32, (C, Bb, N), 0)
    label_logit = jnp.sum(jnp.where(cls_iota == labels[None], conf, 0.0), axis=0)
    ce = logz - label_logit                                           # (Bb, N)

    # ---- hard negative mining: exact per-row top-k via 4-way bit-pattern search
    num_pos = jnp.sum(pos_f, axis=1, keepdims=True)                   # (Bb, 1)
    k = jnp.ceil(num_pos * jnp.float32(neg_pos_ratio))                # negatives to keep

    bits = pltpu.bitcast(bg_loss, jnp.int32)                          # monotone for x >= 0
    bits_m = jnp.where(neg, bits, jnp.int32(-1))                      # hoisted mask (probes >= 0)

    def count_ge(t):                                                  # t: (Bb, 1) int32
        return jnp.sum((bits_m >= t).astype(jnp.float32), axis=1, keepdims=True)

    def val_body(_, carry):
        lo, hi = carry
        span = hi - lo
        p1 = lo + ((span + 3) >> 2)
        p2 = lo + ((span + 1) >> 1)
        p3 = hi - (span >> 2)
        c1 = count_ge(p1) >= k        # three independent probes: their reductions
        c2 = count_ge(p2) >= k        # overlap, shrinking the serial critical path
        c3 = count_ge(p3) >= k        # (c3 => c2 => c1 since count_ge is non-increasing)
        lo = jnp.where(c3, p3, jnp.where(c2, p2, jnp.where(c1, p1, lo)))
        hi = jnp.where(c3, hi, jnp.where(c2, p3 - 1, jnp.where(c1, p2 - 1, p1 - 1)))
        return lo, hi

    lo0 = jnp.zeros((Bb, 1), jnp.int32)
    hi0 = jnp.full((Bb, 1), _INF_BITS, jnp.int32)
    t_star, _ = lax.fori_loop(0, _VAL_ITERS, val_body, (lo0, hi0), unroll=True)

    above = bits_m > t_star                                           # strictly above k-th value
    tied = bits_m == t_star                                           # tie group at the k-th value
    count_gt = jnp.sum(above.astype(jnp.float32), axis=1, keepdims=True)
    r = k - count_gt                                                  # ties to keep (lowest index first)

    tied_idx = jnp.where(tied, lane_idx, jnp.int32(N))                # hoisted mask (probes <= N)

    def count_lt(c):                                                  # c: (Bb, 1) int32
        return jnp.sum((tied_idx < c).astype(jnp.float32), axis=1, keepdims=True)

    def idx_body(_, carry):                                           # 4-way lower_bound on index cutoff
        lo, hi = carry
        span = hi - lo
        q1 = lo + (span >> 2)
        q2 = lo + (span >> 1)
        q3 = hi - ((span + 3) >> 2)
        d1 = count_lt(q1) >= r
        d2 = count_lt(q2) >= r
        d3 = count_lt(q3) >= r
        hi = jnp.where(d1, q1, jnp.where(d2, q2, jnp.where(d3, q3, hi)))
        lo = jnp.where(d1, lo, jnp.where(d2, q1 + 1, jnp.where(d3, q2 + 1, q3 + 1)))
        return lo, hi

    ilo0 = jnp.zeros((Bb, 1), jnp.int32)
    ihi0 = jnp.full((Bb, 1), N, jnp.int32)
    _, cutoff = lax.fori_loop(0, idx_iters, idx_body, (ilo0, ihi0), unroll=True)

    mask = pos | above | (tied & (lane_idx < cutoff))                 # (Bb, N)

    cls_sum = jnp.sum(jnp.where(mask, ce, 0.0))

    # ---- smooth "exponential" L1 on positive priors
    diff = jnp.abs(pred - gt)                                         # (4, Bb, N)
    sm_elem = jnp.where(
        diff < 1.0,
        a_const * (diff + (1.0 / ALPHA) * (jnp.exp(-ALPHA * diff) - 1.0)),
        BETA * diff + c_const,
    )
    sm_sum = jnp.sum(sm_elem * pos_f[None])                           # broadcast over 4 coords
    npos_sum = jnp.sum(pos_f)

    # ---- lane-dense per-block partials: sublanes 0/1/2 of one (8, 128) tile
    sub = lax.broadcasted_iota(jnp.int32, (1, 8, 128), 1)
    out_ref[...] = (jnp.where(sub == 0, cls_sum, 0.0)
                    + jnp.where(sub == 1, sm_sum, 0.0)
                    + jnp.where(sub == 2, npos_sum, 0.0))


@functools.partial(jax.jit, static_argnums=(0,))
def _multibox_loss_forward(neg_pos_ratio, confidence, predicted_locations,
                           labels, gt_locations):
    B, N, C = confidence.shape

    # Class-major / coord-major lane-dense layouts: priors on lanes, batch on
    # sublanes, class / box coord on a leading untiled axis (one fused XLA
    # transpose pass; locations keep their native dtype -- the kernel upcasts).
    conf_t = jnp.transpose(confidence, (2, 0, 1))                     # (C, B, N)
    loc_t = jnp.transpose(predicted_locations, (2, 0, 1))             # (4, B, N)
    gt_t = jnp.transpose(gt_locations, (2, 0, 1))                     # (4, B, N)
    labels_t = labels.astype(jnp.int32).reshape(B, N)                 # (B, N)

    # Pad priors to a lane multiple; padded lanes are excluded from pos/neg by
    # one static mask in the kernel so the mining loops see dense vregs.
    n_pad = (-N) % 128
    if n_pad:
        conf_t = jnp.pad(conf_t, ((0, 0), (0, 0), (0, n_pad)))
        loc_t = jnp.pad(loc_t, ((0, 0), (0, 0), (0, n_pad)))
        gt_t = jnp.pad(gt_t, ((0, 0), (0, 0), (0, n_pad)))
        labels_t = jnp.pad(labels_t, ((0, 0), (0, n_pad)))
    Np = N + n_pad

    # Batch block: a multiple of 8 (f32 sublanes), sized for ~6 MiB so the
    # double-buffered inputs fit scoped VMEM on v5e/v6e/v7x, and >= 2 grid
    # steps when the batch allows (keeps both v7x TensorCores busy).
    row_bytes = (C * confidence.dtype.itemsize
                 + 4 * predicted_locations.dtype.itemsize
                 + 4 * gt_locations.dtype.itemsize + 4) * Np
    bpad8 = -(-B // 8) * 8
    bb = max(8, ((6 * 1024 * 1024) // row_bytes) // 8 * 8)
    bb = min(bb, bpad8)
    if bpad8 >= 16:
        bb = min(bb, max(8, (bpad8 // 16) * 8))
    b_pad = (-B) % bb
    if b_pad:   # zero rows have no positives and k = 0 -> contribute exactly 0
        conf_t = jnp.pad(conf_t, ((0, 0), (0, b_pad), (0, 0)))
        loc_t = jnp.pad(loc_t, ((0, 0), (0, b_pad), (0, 0)))
        gt_t = jnp.pad(gt_t, ((0, 0), (0, b_pad), (0, 0)))
        labels_t = jnp.pad(labels_t, ((0, b_pad), (0, 0)))
    g = (B + b_pad) // bb

    blk_bytes = bb * row_bytes
    vmem_limit = int(min(max(32 << 20, int(2.5 * blk_bytes) + (4 << 20)), 48 << 20))

    a_const = float(BETA / (1.0 - math.exp(-ALPHA)))
    c_const = float(a_const - BETA - BETA / ALPHA)
    idx_iters, s = 1, Np          # 4-way index search: floor(log4(Np)) + 1 (+1 margin)
    while s:
        s //= 4
        idx_iters += 1

    kernel = functools.partial(
        _multibox_loss_kernel,
        neg_pos_ratio=float(neg_pos_ratio),
        a_const=a_const, c_const=c_const,
        n_valid=N, idx_iters=idx_iters)

    parts = pl.pallas_call(
        kernel,
        out_shape=jax.ShapeDtypeStruct((g, 8, 128), jnp.float32),
        grid_spec=pltpu.PrefetchScalarGridSpec(
            num_scalar_prefetch=0,
            grid=(g,),
            in_specs=[
                pl.BlockSpec((C, bb, Np), lambda i: (0, i, 0)),
                pl.BlockSpec((4, bb, Np), lambda i: (0, i, 0)),
                pl.BlockSpec((4, bb, Np), lambda i: (0, i, 0)),
                pl.BlockSpec((bb, Np), lambda i: (i, 0)),
            ],
            out_specs=pl.BlockSpec((1, 8, 128), lambda i: (i, 0, 0)),
        ),
        compiler_params=pltpu.CompilerParams(
            dimension_semantics=("parallel",),
            vmem_limit_bytes=vmem_limit),
    )(conf_t, loc_t, gt_t, labels_t)

    cls_sum = jnp.sum(parts[:, 0, 0])
    sm_sum = jnp.sum(parts[:, 1, 0])
    num_pos = jnp.sum(parts[:, 2, 0])
    # TODO(synk): num_pos == 0 yields Inf/NaN, identical to the torch reference.
    return sm_sum / num_pos, cls_sum / num_pos


class MultiboxLoss:
    """JAX/Pallas equivalent of vision/nn/multibox_loss_ex.MultiboxLoss."""

    def __init__(self, priors, iou_threshold, neg_pos_ratio,
                 center_variance, size_variance, device=None):
        # priors / iou_threshold / variances / device mirror the torch __init__
        # but are not used by the forward pass.
        self.priors = priors
        self.iou_threshold = iou_threshold
        self.neg_pos_ratio = neg_pos_ratio
        self.center_variance = center_variance
        self.size_variance = size_variance

    def __call__(self, confidence, predicted_locations, labels, gt_locations):
        return _multibox_loss_forward(float(self.neg_pos_ratio), confidence,
                                      predicted_locations, labels, gt_locations)


def _reference(confidence, predicted_locations, labels, gt_locations, neg_pos_ratio):
    """Pure-JAX mirror of the torch forward (for correctness checking)."""
    logsm = jax.nn.log_softmax(confidence, axis=2)
    loss = -logsm[:, :, 0]
    pos_mask = labels > 0
    num_pos_b = pos_mask.sum(axis=1, keepdims=True)
    num_neg = num_pos_b * neg_pos_ratio
    loss = jnp.where(pos_mask, -jnp.inf, loss)
    indexes = jnp.argsort(-loss, axis=1, stable=True)   # descending sort indices (stable)
    orders = jnp.argsort(indexes, axis=1, stable=True)  # rank of each element
    neg_mask = orders < num_neg
    mask = pos_mask | neg_mask

    ce = -jnp.take_along_axis(logsm, labels[..., None], axis=2)[..., 0]
    cls_loss = jnp.sum(jnp.where(mask, ce, 0.0))

    a = BETA / (1.0 - np.exp(-ALPHA))
    c = a - BETA - BETA / ALPHA
    diff = jnp.abs(predicted_locations - gt_locations)
    sm = jnp.where(diff < 1.0,
                   a * (diff + (1.0 / ALPHA) * (jnp.exp(-ALPHA * diff) - 1.0)),
                   BETA * diff + c)
    sm_loss = jnp.sum(jnp.where(pos_mask[..., None], sm, 0.0))

    num_pos = pos_mask.sum().astype(jnp.float32)
    return sm_loss / num_pos, cls_loss / num_pos


if __name__ == "__main__":
    B, N, C = 2, 128, 8
    key = jax.random.PRNGKey(0)
    k1, k2, k3, k4 = jax.random.split(key, 4)

    confidence = jax.random.normal(k1, (B, N, C), dtype=jnp.float32)
    predicted_locations = 0.5 * jax.random.normal(k2, (B, N, 4), dtype=jnp.float32)
    gt_locations = 0.5 * jax.random.normal(k3, (B, N, 4), dtype=jnp.float32)
    # ~25% positive priors: labels in [0, C), most mapped to background (0).
    raw = jax.random.randint(k4, (B, N), 0, 4 * (C - 1), dtype=jnp.int32)
    labels = jnp.where(raw < (C - 1), raw + 1, 0)

    # Deterministic "priors" (unused in forward, mirrors the torch __init__ args).
    priors = jnp.linspace(0.0, 1.0, N * 4, dtype=jnp.float32).reshape(N, 4)

    loss_mod = MultiboxLoss(priors, iou_threshold=0.5, neg_pos_ratio=3,
                            center_variance=0.1, size_variance=0.2)

    smooth_loss, class_loss = loss_mod(confidence, predicted_locations,
                                       labels, gt_locations)
    smooth_loss = jax.block_until_ready(smooth_loss)
    class_loss = jax.block_until_ready(class_loss)

    ref_smooth, ref_class = _reference(confidence, predicted_locations, labels,
                                       gt_locations, neg_pos_ratio=3)

    assert np.allclose(np.asarray(smooth_loss), np.asarray(ref_smooth),
                       rtol=1e-3, atol=1e-4), (smooth_loss, ref_smooth)
    assert np.allclose(np.asarray(class_loss), np.asarray(ref_class),
                       rtol=1e-3, atol=1e-4), (class_loss, ref_class)

    print("KERNEL_OK")
</pallas_src>

<mosaic_0001>
module attributes {stable_mosaic.version = 11 : i64} {
  func.func @_multibox_loss_kernel(%arg0: i32, %arg1: memref<8x8x128xf32, #tpu.memory_space<vmem>>, %arg2: memref<4x8x128xf32, #tpu.memory_space<vmem>>, %arg3: memref<4x8x128xf32, #tpu.memory_space<vmem>>, %arg4: memref<8x128xi32, #tpu.memory_space<vmem>>, %arg5: memref<1x8x128xf32, #tpu.memory_space<vmem>>) attributes {dimension_semantics = [#tpu.dimension_semantics<parallel>], iteration_bounds = array<i64: 1>, scalar_prefetch = 0 : i64, scratch_operands = 0 : i64, tpu.core_type = #tpu.core_type<tc>, window_params = [{transform_indices = @transform_0, window_bounds = array<i64: 8, 8, 128>}, {transform_indices = @transform_1, window_bounds = array<i64: 4, 8, 128>}, {transform_indices = @transform_2, window_bounds = array<i64: 4, 8, 128>}, {transform_indices = @transform_3, window_bounds = array<i64: 8, 128>}, {transform_indices = @transform_4, window_bounds = array<i64: 1, 8, 128>}]} {
    %c0 = arith.constant 0 : index
    %c0_0 = arith.constant 0 : index
    %c0_1 = arith.constant 0 : index
    %0 = vector.load %arg1[%c0, %c0_0, %c0_1] : memref<8x8x128xf32, #tpu.memory_space<vmem>>, vector<8x8x128xf32>
    %c0_2 = arith.constant 0 : index
    %c0_3 = arith.constant 0 : index
    %c0_4 = arith.constant 0 : index
    %1 = vector.load %arg2[%c0_2, %c0_3, %c0_4] : memref<4x8x128xf32, #tpu.memory_space<vmem>>, vector<4x8x128xf32>
    %c0_5 = arith.constant 0 : index
    %c0_6 = arith.constant 0 : index
    %c0_7 = arith.constant 0 : index
    %2 = vector.load %arg3[%c0_5, %c0_6, %c0_7] : memref<4x8x128xf32, #tpu.memory_space<vmem>>, vector<4x8x128xf32>
    %c0_8 = arith.constant 0 : index
    %c0_9 = arith.constant 0 : index
    %3 = vector.load %arg4[%c0_8, %c0_9] : memref<8x128xi32, #tpu.memory_space<vmem>>, vector<8x128xi32>
    %4 = tpu.iota {dimensions = array<i32: 1>} : vector<8x128xi32>
    %c0_i32 = arith.constant 0 : i32
    %5 = vector.broadcast %c0_i32 : i32 to vector<8x128xi32>
    %6 = arith.cmpi sgt, %3, %5 : vector<8x128xi32>
    %cst = arith.constant dense<true> : vector<8x128xi1>
    %7 = arith.xori %6, %cst : vector<8x128xi1>
    %8 = arith.extui %6 : vector<8x128xi1> to vector<8x128xi32>
    %9 = arith.sitofp %8 : vector<8x128xi32> to vector<8x128xf32>
    %cst_10 = arith.constant dense<0xFF800000> : vector<8x128xf32>
    %10 = vector.multi_reduction <maximumf>, %0, %cst_10 [0] : vector<8x8x128xf32> to vector<8x128xf32>
    %11 = vector.shape_cast %10 : vector<8x128xf32> to vector<1x8x128xf32>
    %12 = vector.broadcast %11 : vector<1x8x128xf32> to vector<8x8x128xf32>
    %13 = arith.subf %0, %12 : vector<8x8x128xf32>
    %14 = math.exp %13 : vector<8x8x128xf32>
    %cst_11 = arith.constant dense<0.000000e+00> : vector<8x128xf32>
    %15 = vector.multi_reduction <add>, %14, %cst_11 [0] : vector<8x8x128xf32> to vector<8x128xf32>
    %16 = math.log %15 : vector<8x128xf32>
    %17 = arith.addf %10, %16 : vector<8x128xf32>
    %18 = vector.extract_strided_slice %0 {offsets = [0, 0, 0], sizes = [1, 8, 128], strides = [1, 1, 1]} : vector<8x8x128xf32> to vector<1x8x128xf32>
    %19 = vector.shape_cast %18 : vector<1x8x128xf32> to vector<8x128xf32>
    %20 = arith.subf %17, %19 : vector<8x128xf32>
    %cst_12 = arith.constant 0.000000e+00 : f32
    %21 = vector.broadcast %cst_12 : f32 to vector<8x128xf32>
    %22 = arith.maximumf %20, %21 : vector<8x128xf32>
    %23 = tpu.iota {dimensions = array<i32: 0>} : vector<8x8x128xi32>
    %24 = vector.shape_cast %3 : vector<8x128xi32> to vector<1x8x128xi32>
    %25 = vector.broadcast %24 : vector<1x8x128xi32> to vector<8x8x128xi32>
    %26 = arith.cmpi eq, %23, %25 : vector<8x8x128xi32>
    %cst_13 = arith.constant 0.000000e+00 : f32
    %27 = vector.broadcast %cst_13 : f32 to vector<8x8x128xf32>
    %28 = arith.select %26, %0, %27 : vector<8x8x128xi1>, vector<8x8x128xf32>
    %cst_14 = arith.constant dense<0.000000e+00> : vector<8x128xf32>
    %29 = vector.multi_reduction <add>, %28, %cst_14 [0] : vector<8x8x128xf32> to vector<8x128xf32>
    %30 = arith.subf %17, %29 : vector<8x128xf32>
    %cst_15 = arith.constant dense<0.000000e+00> : vector<8xf32>
    %31 = vector.multi_reduction <add>, %9, %cst_15 [1] : vector<8x128xf32> to vector<8xf32>
    %32 = vector.shape_cast %31 : vector<8xf32> to vector<8x1xf32>
    %cst_16 = arith.constant 3.000000e+00 : f32
    %33 = vector.broadcast %cst_16 : f32 to vector<8x1xf32>
    %34 = arith.mulf %32, %33 : vector<8x1xf32>
    %35 = math.ceil %34 : vector<8x1xf32>
    %36 = tpu.bitcast %22 : vector<8x128xf32> -> vector<8x128xi32>
    %c-1_i32 = arith.constant -1 : i32
    %37 = vector.broadcast %c-1_i32 : i32 to vector<8x128xi32>
    %38 = arith.select %7, %36, %37 : vector<8x128xi1>, vector<8x128xi32>
    %c0_i32_17 = arith.constant 0 : i32
    %39 = vector.broadcast %c0_i32_17 : i32 to vector<8x1xi32>
    %c2139095040_i32 = arith.constant 2139095040 : i32
    %40 = vector.broadcast %c2139095040_i32 : i32 to vector<8x1xi32>
    %c0_i32_18 = arith.constant 0 : i32
    %41 = arith.subi %40, %39 : vector<8x1xi32>
    %c3_i32 = arith.constant 3 : i32
    %42 = vector.broadcast %c3_i32 : i32 to vector<8x1xi32>
    %43 = arith.addi %41, %42 : vector<8x1xi32>
    %c2_i32 = arith.constant 2 : i32
    %44 = vector.broadcast %c2_i32 : i32 to vector<8x1xi32>
    %45 = arith.shrsi %43, %44 : vector<8x1xi32>
    %46 = arith.addi %39, %45 : vector<8x1xi32>
    %c1_i32 = arith.constant 1 : i32
    %47 = vector.broadcast %c1_i32 : i32 to vector<8x1xi32>
    %48 = arith.addi %41, %47 : vector<8x1xi32>
    %c1_i32_19 = arith.constant 1 : i32
    %49 = vector.broadcast %c1_i32_19 : i32 to vector<8x1xi32>
    %50 = arith.shrsi %48, %49 : vector<8x1xi32>
    %51 = arith.addi %39, %50 : vector<8x1xi32>
    %c2_i32_20 = arith.constant 2 : i32
    %52 = vector.broadcast %c2_i32_20 : i32 to vector<8x1xi32>
    %53 = arith.shrsi %41, %52 : vector<8x1xi32>
    %54 = arith.subi %40, %53 : vector<8x1xi32>
    %55 = vector.broadcast %46 : vector<8x1xi32> to vector<8x128xi32>
    %56 = arith.cmpi sge, %38, %55 : vector<8x128xi32>
    %57 = arith.extui %56 : vector<8x128xi1> to vector<8x128xi32>
    %58 = arith.sitofp %57 : vector<8x128xi32> to vector<8x128xf32>
    %cst_21 = arith.constant dense<0.000000e+00> : vector<8xf32>
    %59 = vector.multi_reduction <add>, %58, %cst_21 [1] : vector<8x128xf32> to vector<8xf32>
    %60 = vector.shape_cast %59 : vector<8xf32> to vector<8x1xf32>
    %61 = arith.cmpf oge, %60, %35 : vector<8x1xf32>
    %62 = vector.broadcast %51 : vector<8x1xi32> to vector<8x128xi32>
    %63 = arith.cmpi sge, %38, %62 : vector<8x128xi32>
    %64 = arith.extui %63 : vector<8x128xi1> to vector<8x128xi32>
    %65 = arith.sitofp %64 : vector<8x128xi32> to vector<8x128xf32>
    %cst_22 = arith.constant dense<0.000000e+00> : vector<8xf32>
    %66 = vector.multi_reduction <add>, %65, %cst_22 [1] : vector<8x128xf32> to vector<8xf32>
    %67 = vector.shape_cast %66 : vector<8xf32> to vector<8x1xf32>
    %68 = arith.cmpf oge, %67, %35 : vector<8x1xf32>
    %69 = vector.broadcast %54 : vector<8x1xi32> to vector<8x128xi32>
    %70 = arith.cmpi sge, %38, %69 : vector<8x128xi32>
    %71 = arith.extui %70 : vector<8x128xi1> to vector<8x128xi32>
    %72 = arith.sitofp %71 : vector<8x128xi32> to vector<8x128xf32>
    %cst_23 = arith.constant dense<0.000000e+00> : vector<8xf32>
    %73 = vector.multi_reduction <add>, %72, %cst_23 [1] : vector<8x128xf32> to vector<8xf32>
    %74 = vector.shape_cast %73 : vector<8xf32> to vector<8x1xf32>
    %75 = arith.cmpf oge, %74, %35 : vector<8x1xf32>
    %76 = arith.select %61, %46, %39 : vector<8x1xi1>, vector<8x1xi32>
    %77 = arith.select %68, %51, %76 : vector<8x1xi1>, vector<8x1xi32>
    %78 = arith.select %75, %54, %77 : vector<8x1xi1>, vector<8x1xi32>
    %c1_i32_24 = arith.constant 1 : i32
    %79 = vector.broadcast %c1_i32_24 : i32 to vector<8x1xi32>
    %80 = arith.subi %54, %79 : vector<8x1xi32>
    %c1_i32_25 = arith.constant 1 : i32
    %81 = vector.broadcast %c1_i32_25 : i32 to vector<8x1xi32>
    %82 = arith.subi %51, %81 : vector<8x1xi32>
    %c1_i32_26 = arith.constant 1 : i32
    %83 = vector.broadcast %c1_i32_26 : i32 to vector<8x1xi32>
    %84 = arith.subi %46, %83 : vector<8x1xi32>
    %85 = arith.select %61, %82, %84 : vector<8x1xi1>, vector<8x1xi32>
    %86 = arith.select %68, %80, %85 : vector<8x1xi1>, vector<8x1xi32>
    %87 = arith.select %75, %40, %86 : vector<8x1xi1>, vector<8x1xi32>
    %c1_i32_27 = arith.constant 1 : i32
    %88 = arith.subi %87, %78 : vector<8x1xi32>
    %c3_i32_28 = arith.constant 3 : i32
    %89 = vector.broadcast %c3_i32_28 : i32 to vector<8x1xi32>
    %90 = arith.addi %88, %89 : vector<8x1xi32>
    %c2_i32_29 = arith.constant 2 : i32
    %91 = vector.broadcast %c2_i32_29 : i32 to vector<8x1xi32>
    %92 = arith.shrsi %90, %91 : vector<8x1xi32>
    %93 = arith.addi %78, %92 : vector<8x1xi32>
    %c1_i32_30 = arith.constant 1 : i32
    %94 = vector.broadcast %c1_i32_30 : i32 to vector<8x1xi32>
    %95 = arith.addi %88, %94 : vector<8x1xi32>
    %c1_i32_31 = arith.constant 1 : i32
    %96 = vector.broadcast %c1_i32_31 : i32 to vector<8x1xi32>
    %97 = arith.shrsi %95, %96 : vector<8x1xi32>
    %98 = arith.addi %78, %97 : vector<8x1xi32>
    %c2_i32_32 = arith.constant 2 : i32
    %99 = vector.broadcast %c2_i32_32 : i32 to vector<8x1xi32>
    %100 = arith.shrsi %88, %99 : vector<8x1xi32>
    %101 = arith.subi %87, %100 : vector<8x1xi32>
    %102 = vector.broadcast %93 : vector<8x1xi32> to vector<8x128xi32>
    %103 = arith.cmpi sge, %38, %102 : vector<8x128xi32>
    %104 = arith.extui %103 : vector<8x128xi1> to vector<8x128xi32>
    %105 = arith.sitofp %104 : vector<8x128xi32> to vector<8x128xf32>
    %cst_33 = arith.constant dense<0.000000e+00> : vector<8xf32>
    %106 = vector.multi_reduction <add>, %105, %cst_33 [1] : vector<8x128xf32> to vector<8xf32>
    %107 = vector.shape_cast %106 : vector<8xf32> to vector<8x1xf32>
    %108 = arith.cmpf oge, %107, %35 : vector<8x1xf32>
    %109 = vector.broadcast %98 : vector<8x1xi32> to vector<8x128xi32>
    %110 = arith.cmpi sge, %38, %109 : vector<8x128xi32>
    %111 = arith.extui %110 : vector<8x128xi1> to vector<8x128xi32>
    %112 = arith.sitofp %111 : vector<8x128xi32> to vector<8x128xf32>
    %cst_34 = arith.constant dense<0.000000e+00> : vector<8xf32>
    %113 = vector.multi_reduction <add>, %112, %cst_34 [1] : vector<8x128xf32> to vector<8xf32>
    %114 = vector.shape_cast %113 : vector<8xf32> to vector<8x1xf32>
    %115 = arith.cmpf oge, %114, %35 : vector<8x1xf32>
    %116 = vector.broadcast %101 : vector<8x1xi32> to vector<8x128xi32>
    %117 = arith.cmpi sge, %38, %116 : vector<8x128xi32>
    %118 = arith.extui %117 : vector<8x128xi1> to vector<8x128xi32>
    %119 = arith.sitofp %118 : vector<8x128xi32> to vector<8x128xf32>
    %cst_35 = arith.constant dense<0.000000e+00> : vector<8xf32>
    %120 = vector.multi_reduction <add>, %119, %cst_35 [1] : vector<8x128xf32> to vector<8xf32>
    %121 = vector.shape_cast %120 : vector<8xf32> to vector<8x1xf32>
    %122 = arith.cmpf oge, %121, %35 : vector<8x1xf32>
    %123 = arith.select %108, %93, %78 : vector<8x1xi1>, vector<8x1xi32>
    %124 = arith.select %115, %98, %123 : vector<8x1xi1>, vector<8x1xi32>
    %125 = arith.select %122, %101, %124 : vector<8x1xi1>, vector<8x1xi32>
    %c1_i32_36 = arith.constant 1 : i32
    %126 = vector.broadcast %c1_i32_36 : i32 to vector<8x1xi32>
    %127 = arith.subi %101, %126 : vector<8x1xi32>
    %c1_i32_37 = arith.constant 1 : i32
    %128 = vector.broadcast %c1_i32_37 : i32 to vector<8x1xi32>
    %129 = arith.subi %98, %128 : vector<8x1xi32>
    %c1_i32_38 = arith.constant 1 : i32
    %130 = vector.broadcast %c1_i32_38 : i32 to vector<8x1xi32>
    %131 = arith.subi %93, %130 : vector<8x1xi32>
    %132 = arith.select %108, %129, %131 : vector<8x1xi1>, vector<8x1xi32>
    %133 = arith.select %115, %127, %132 : vector<8x1xi1>, vector<8x1xi32>
    %134 = arith.select %122, %87, %133 : vector<8x1xi1>, vector<8x1xi32>
    %c2_i32_39 = arith.constant 2 : i32
    %135 = arith.subi %134, %125 : vector<8x1xi32>
    %c3_i32_40 = arith.constant 3 : i32
    %136 = vector.broadcast %c3_i32_40 : i32 to vector<8x1xi32>
    %137 = arith.addi %135, %136 : vector<8x1xi32>
    %c2_i32_41 = arith.constant 2 : i32
    %138 = vector.broadcast %c2_i32_41 : i32 to vector<8x1xi32>
    %139 = arith.shrsi %137, %138 : vector<8x1xi32>
    %140 = arith.addi %125, %139 : vector<8x1xi32>
    %c1_i32_42 = arith.constant 1 : i32
    %141 = vector.broadcast %c1_i32_42 : i32 to vector<8x1xi32>
    %142 = arith.addi %135, %141 : vector<8x1xi32>
    %c1_i32_43 = arith.constant 1 : i32
    %143 = vector.broadcast %c1_i32_43 : i32 to vector<8x1xi32>
    %144 = arith.shrsi %142, %143 : vector<8x1xi32>
    %145 = arith.addi %125, %144 : vector<8x1xi32>
    %c2_i32_44 = arith.constant 2 : i32
    %146 = vector.broadcast %c2_i32_44 : i32 to vector<8x1xi32>
    %147 = arith.shrsi %135, %146 : vector<8x1xi32>
    %148 = arith.subi %134, %147 : vector<8x1xi32>
    %149 = vector.broadcast %140 : vector<8x1xi32> to vector<8x128xi32>
    %150 = arith.cmpi sge, %38, %149 : vector<8x128xi32>
    %151 = arith.extui %150 : vector<8x128xi1> to vector<8x128xi32>
    %152 = arith.sitofp %151 : vector<8x128xi32> to vector<8x128xf32>
    %cst_45 = arith.constant dense<0.000000e+00> : vector<8xf32>
    %153 = vector.multi_reduction <add>, %152, %cst_45 [1] : vector<8x128xf32> to vector<8xf32>
    %154 = vector.shape_cast %153 : vector<8xf32> to vector<8x1xf32>
    %155 = arith.cmpf oge, %154, %35 : vector<8x1xf32>
    %156 = vector.broadcast %145 : vector<8x1xi32> to vector<8x128xi32>
    %157 = arith.cmpi sge, %38, %156 : vector<8x128xi32>
    %158 = arith.extui %157 : vector<8x128xi1> to vector<8x128xi32>
    %159 = arith.sitofp %158 : vector<8x128xi32> to vector<8x128xf32>
    %cst_46 = arith.constant dense<0.000000e+00> : vector<8xf32>
    %160 = vector.multi_reduction <add>, %159, %cst_46 [1] : vector<8x128xf32> to vector<8xf32>
    %161 = vector.shape_cast %160 : vector<8xf32> to vector<8x1xf32>
    %162 = arith.cmpf oge, %161, %35 : vector<8x1xf32>
    %163 = vector.broadcast %148 : vector<8x1xi32> to vector<8x128xi32>
    %164 = arith.cmpi sge, %38, %163 : vector<8x128xi32>
    %165 = arith.extui %164 : vector<8x128xi1> to vector<8x128xi32>
    %166 = arith.sitofp %165 : vector<8x128xi32> to vector<8x128xf32>
    %cst_47 = arith.constant dense<0.000000e+00> : vector<8xf32>
    %167 = vector.multi_reduction <add>, %166, %cst_47 [1] : vector<8x128xf32> to vector<8xf32>
    %168 = vector.shape_cast %167 : vector<8xf32> to vector<8x1xf32>
    %169 = arith.cmpf oge, %168, %35 : vector<8x1xf32>
    %170 = arith.select %155, %140, %125 : vector<8x1xi1>, vector<8x1xi32>
    %171 = arith.select %162, %145, %170 : vector<8x1xi1>, vector<8x1xi32>
    %172 = arith.select %169, %148, %171 : vector<8x1xi1>, vector<8x1xi32>
    %c1_i32_48 = arith.constant 1 : i32
    %173 = vector.broadcast %c1_i32_48 : i32 to vector<8x1xi32>
    %174 = arith.subi %148, %173 : vector<8x1xi32>
    %c1_i32_49 = arith.constant 1 : i32
    %175 = vector.broadcast %c1_i32_49 : i32 to vector<8x1xi32>
    %176 = arith.subi %145, %175 : vector<8x1xi32>
    %c1_i32_50 = arith.constant 1 : i32
    %177 = vector.broadcast %c1_i32_50 : i32 to vector<8x1xi32>
    %178 = arith.subi %140, %177 : vector<8x1xi32>
    %179 = arith.select %155, %176, %178 : vector<8x1xi1>, vector<8x1xi32>
    %180 = arith.select %162, %174, %179 : vector<8x1xi1>, vector<8x1xi32>
    %181 = arith.select %169, %134, %180 : vector<8x1xi1>, vector<8x1xi32>
    %c3_i32_51 = arith.constant 3 : i32
    %182 = arith.subi %181, %172 : vector<8x1xi32>
    %c3_i32_52 = arith.constant 3 : i32
    %183 = vector.broadcast %c3_i32_52 : i32 to vector<8x1xi32>
    %184 = arith.addi %182, %183 : vector<8x1xi32>
    %c2_i32_53 = arith.constant 2 : i32
    %185 = vector.broadcast %c2_i32_53 : i32 to vector<8x1xi32>
    %186 = arith.shrsi %184, %185 : vector<8x1xi32>
    %187 = arith.addi %172, %186 : vector<8x1xi32>
    %c1_i32_54 = arith.constant 1 : i32
    %188 = vector.broadcast %c1_i32_54 : i32 to vector<8x1xi32>
    %189 = arith.addi %182, %188 : vector<8x1xi32>
    %c1_i32_55 = arith.constant 1 : i32
    %190 = vector.broadcast %c1_i32_55 : i32 to vector<8x1xi32>
    %191 = arith.shrsi %189, %190 : vector<8x1xi32>
    %192 = arith.addi %172, %191 : vector<8x1xi32>
    %c2_i32_56 = arith.constant 2 : i32
    %193 = vector.broadcast %c2_i32_56 : i32 to vector<8x1xi32>
    %194 = arith.shrsi %182, %193 : vector<8x1xi32>
    %195 = arith.subi %181, %194 : vector<8x1xi32>
    %196 = vector.broadcast %187 : vector<8x1xi32> to vector<8x128xi32>
    %197 = arith.cmpi sge, %38, %196 : vector<8x128xi32>
    %198 = arith.extui %197 : vector<8x128xi1> to vector<8x128xi32>
    %199 = arith.sitofp %198 : vector<8x128xi32> to vector<8x128xf32>
    %cst_57 = arith.constant dense<0.000000e+00> : vector<8xf32>
    %200 = vector.multi_reduction <add>, %199, %cst_57 [1] : vector<8x128xf32> to vector<8xf32>
    %201 = vector.shape_cast %200 : vector<8xf32> to vector<8x1xf32>
    %202 = arith.cmpf oge, %201, %35 : vector<8x1xf32>
    %203 = vector.broadcast %192 : vector<8x1xi32> to vector<8x128xi32>
    %204 = arith.cmpi sge, %38, %203 : vector<8x128xi32>
    %205 = arith.extui %204 : vector<8x128xi1> to vector<8x128xi32>
    %206 = arith.sitofp %205 : vector<8x128xi32> to vector<8x128xf32>
    %cst_58 = arith.constant dense<0.000000e+00> : vector<8xf32>
    %207 = vector.multi_reduction <add>, %206, %cst_58 [1] : vector<8x128xf32> to vector<8xf32>
    %208 = vector.shape_cast %207 : vector<8xf32> to vector<8x1xf32>
    %209 = arith.cmpf oge, %208, %35 : vector<8x1xf32>
    %210 = vector.broadcast %195 : vector<8x1xi32> to vector<8x128xi32>
    %211 = arith.cmpi sge, %38, %210 : vector<8x128xi32>
    %212 = arith.extui %211 : vector<8x128xi1> to vector<8x128xi32>
    %213 = arith.sitofp %212 : vector<8x128xi32> to vector<8x128xf32>
    %cst_59 = arith.constant dense<0.000000e+00> : vector<8xf32>
    %214 = vector.multi_reduction <add>, %213, %cst_59 [1] : vector<8x128xf32> to vector<8xf32>
    %215 = vector.shape_cast %214 : vector<8xf32> to vector<8x1xf32>
    %216 = arith.cmpf oge, %215, %35 : vector<8x1xf32>
    %217 = arith.select %202, %187, %172 : vector<8x1xi1>, vector<8x1xi32>
    %218 = arith.select %209, %192, %217 : vector<8x1xi1>, vector<8x1xi32>
    %219 = arith.select %216, %195, %218 : vector<8x1xi1>, vector<8x1xi32>
    %c1_i32_60 = arith.constant 1 : i32
    %220 = vector.broadcast %c1_i32_60 : i32 to vector<8x1xi32>
    %221 = arith.subi %195, %220 : vector<8x1xi32>
    %c1_i32_61 = arith.constant 1 : i32
    %222 = vector.broadcast %c1_i32_61 : i32 to vector<8x1xi32>
    %223 = arith.subi %192, %222 : vector<8x1xi32>
    %c1_i32_62 = arith.constant 1 : i32
    %224 = vector.broadcast %c1_i32_62 : i32 to vector<8x1xi32>
    %225 = arith.subi %187, %224 : vector<8x1xi32>
    %226 = arith.select %202, %223, %225 : vector<8x1xi1>, vector<8x1xi32>
    %227 = arith.select %209, %221, %226 : vector<8x1xi1>, vector<8x1xi32>
    %228 = arith.select %216, %181, %227 : vector<8x1xi1>, vector<8x1xi32>
    %c4_i32 = arith.constant 4 : i32
    %229 = arith.subi %228, %219 : vector<8x1xi32>
    %c3_i32_63 = arith.constant 3 : i32
    %230 = vector.broadcast %c3_i32_63 : i32 to vector<8x1xi32>
    %231 = arith.addi %229, %230 : vector<8x1xi32>
    %c2_i32_64 = arith.constant 2 : i32
    %232 = vector.broadcast %c2_i32_64 : i32 to vector<8x1xi32>
    %233 = arith.shrsi %231, %232 : vector<8x1xi32>
    %234 = arith.addi %219, %233 : vector<8x1xi32>
    %c1_i32_65 = arith.constant 1 : i32
    %235 = vector.broadcast %c1_i32_65 : i32 to vector<8x1xi32>
    %236 = arith.addi %229, %235 : vector<8x1xi32>
    %c1_i32_66 = arith.constant 1 : i32
    %237 = vector.broadcast %c1_i32_66 : i32 to vector<8x1xi32>
    %238 = arith.shrsi %236, %237 : vector<8x1xi32>
    %239 = arith.addi %219, %238 : vector<8x1xi32>
    %c2_i32_67 = arith.constant 2 : i32
    %240 = vector.broadcast %c2_i32_67 : i32 to vector<8x1xi32>
    %241 = arith.shrsi %229, %240 : vector<8x1xi32>
    %242 = arith.subi %228, %241 : vector<8x1xi32>
    %243 = vector.broadcast %234 : vector<8x1xi32> to vector<8x128xi32>
    %244 = arith.cmpi sge, %38, %243 : vector<8x128xi32>
    %245 = arith.extui %244 : vector<8x128xi1> to vector<8x128xi32>
    %246 = arith.sitofp %245 : vector<8x128xi32> to vector<8x128xf32>
    %cst_68 = arith.constant dense<0.000000e+00> : vector<8xf32>
    %247 = vector.multi_reduction <add>, %246, %cst_68 [1] : vector<8x128xf32> to vector<8xf32>
    %248 = vector.shape_cast %247 : vector<8xf32> to vector<8x1xf32>
    %249 = arith.cmpf oge, %248, %35 : vector<8x1xf32>
    %250 = vector.broadcast %239 : vector<8x1xi32> to vector<8x128xi32>
    %251 = arith.cmpi sge, %38, %250 : vector<8x128xi32>
    %252 = arith.extui %251 : vector<8x128xi1> to vector<8x128xi32>
    %253 = arith.sitofp %252 : vector<8x128xi32> to vector<8x128xf32>
    %cst_69 = arith.constant dense<0.000000e+00> : vector<8xf32>
    %254 = vector.multi_reduction <add>, %253, %cst_69 [1] : vector<8x128xf32> to vector<8xf32>
    %255 = vector.shape_cast %254 : vector<8xf32> to vector<8x1xf32>
    %256 = arith.cmpf oge, %255, %35 : vector<8x1xf32>
    %257 = vector.broadcast %242 : vector<8x1xi32> to vector<8x128xi32>
    %258 = arith.cmpi sge, %38, %257 : vector<8x128xi32>
    %259 = arith.extui %258 : vector<8x128xi1> to vector<8x128xi32>
    %260 = arith.sitofp %259 : vector<8x128xi32> to vector<8x128xf32>
    %cst_70 = arith.constant dense<0.000000e+00> : vector<8xf32>
    %261 = vector.multi_reduction <add>, %260, %cst_70 [1] : vector<8x128xf32> to vector<8xf32>
    %262 = vector.shape_cast %261 : vector<8xf32> to vector<8x1xf32>
    %263 = arith.cmpf oge, %262, %35 : vector<8x1xf32>
    %264 = arith.select %249, %234, %219 : vector<8x1xi1>, vector<8x1xi32>
    %265 = arith.select %256, %239, %264 : vector<8x1xi1>, vector<8x1xi32>
    %266 = arith.select %263, %242, %265 : vector<8x1xi1>, vector<8x1xi32>
    %c1_i32_71 = arith.constant 1 : i32
    %267 = vector.broadcast %c1_i32_71 : i32 to vector<8x1xi32>
    %268 = arith.subi %242, %267 : vector<8x1xi32>
    %c1_i32_72 = arith.constant 1 : i32
    %269 = vector.broadcast %c1_i32_72 : i32 to vector<8x1xi32>
    %270 = arith.subi %239, %269 : vector<8x1xi32>
    %c1_i32_73 = arith.constant 1 : i32
    %271 = vector.broadcast %c1_i32_73 : i32 to vector<8x1xi32>
    %272 = arith.subi %234, %271 : vector<8x1xi32>
    %273 = arith.select %249, %270, %272 : vector<8x1xi1>, vector<8x1xi32>
    %274 = arith.select %256, %268, %273 : vector<8x1xi1>, vector<8x1xi32>
    %275 = arith.select %263, %228, %274 : vector<8x1xi1>, vector<8x1xi32>
    %c5_i32 = arith.constant 5 : i32
    %276 = arith.subi %275, %266 : vector<8x1xi32>
    %c3_i32_74 = arith.constant 3 : i32
    %277 = vector.broadcast %c3_i32_74 : i32 to vector<8x1xi32>
    %278 = arith.addi %276, %277 : vector<8x1xi32>
    %c2_i32_75 = arith.constant 2 : i32
    %279 = vector.broadcast %c2_i32_75 : i32 to vector<8x1xi32>
    %280 = arith.shrsi %278, %279 : vector<8x1xi32>
    %281 = arith.addi %266, %280 : vector<8x1xi32>
    %c1_i32_76 = arith.constant 1 : i32
    %282 = vector.broadcast %c1_i32_76 : i32 to vector<8x1xi32>
    %283 = arith.addi %276, %282 : vector<8x1xi32>
    %c1_i32_77 = arith.constant 1 : i32
    %284 = vector.broadcast %c1_i32_77 : i32 to vector<8x1xi32>
    %285 = arith.shrsi %283, %284 : vector<8x1xi32>
    %286 = arith.addi %266, %285 : vector<8x1xi32>
    %c2_i32_78 = arith.constant 2 : i32
    %287 = vector.broadcast %c2_i32_78 : i32 to vector<8x1xi32>
    %288 = arith.shrsi %276, %287 : vector<8x1xi32>
    %289 = arith.subi %275, %288 : vector<8x1xi32>
    %290 = vector.broadcast %281 : vector<8x1xi32> to vector<8x128xi32>
    %291 = arith.cmpi sge, %38, %290 : vector<8x128xi32>
    %292 = arith.extui %291 : vector<8x128xi1> to vector<8x128xi32>
    %293 = arith.sitofp %292 : vector<8x128xi32> to vector<8x128xf32>
    %cst_79 = arith.constant dense<0.000000e+00> : vector<8xf32>
    %294 = vector.multi_reduction <add>, %293, %cst_79 [1] : vector<8x128xf32> to vector<8xf32>
    %295 = vector.shape_cast %294 : vector<8xf32> to vector<8x1xf32>
    %296 = arith.cmpf oge, %295, %35 : vector<8x1xf32>
    %297 = vector.broadcast %286 : vector<8x1xi32> to vector<8x128xi32>
    %298 = arith.cmpi sge, %38, %297 : vector<8x128xi32>
    %299 = arith.extui %298 : vector<8x128xi1> to vector<8x128xi32>
    %300 = arith.sitofp %299 : vector<8x128xi32> to vector<8x128xf32>
    %cst_80 = arith.constant dense<0.000000e+00> : vector<8xf32>
    %301 = vector.multi_reduction <add>, %300, %cst_80 [1] : vector<8x128xf32> to vector<8xf32>
    %302 = vector.shape_cast %301 : vector<8xf32> to vector<8x1xf32>
    %303 = arith.cmpf oge, %302, %35 : vector<8x1xf32>
    %304 = vector.broadcast %289 : vector<8x1xi32> to vector<8x128xi32>
    %305 = arith.cmpi sge, %38, %304 : vector<8x128xi32>
    %306 = arith.extui %305 : vector<8x128xi1> to vector<8x128xi32>
    %307 = arith.sitofp %306 : vector<8x128xi32> to vector<8x128xf32>
    %cst_81 = arith.constant dense<0.000000e+00> : vector<8xf32>
    %308 = vector.multi_reduction <add>, %307, %cst_81 [1] : vector<8x128xf32> to vector<8xf32>
    %309 = vector.shape_cast %308 : vector<8xf32> to vector<8x1xf32>
    %310 = arith.cmpf oge, %309, %35 : vector<8x1xf32>
    %311 = arith.select %296, %281, %266 : vector<8x1xi1>, vector<8x1xi32>
    %312 = arith.select %303, %286, %311 : vector<8x1xi1>, vector<8x1xi32>
    %313 = arith.select %310, %289, %312 : vector<8x1xi1>, vector<8x1xi32>
    %c1_i32_82 = arith.constant 1 : i32
    %314 = vector.broadcast %c1_i32_82 : i32 to vector<8x1xi32>
    %315 = arith.subi %289, %314 : vector<8x1xi32>
    %c1_i32_83 = arith.constant 1 : i32
    %316 = vector.broadcast %c1_i32_83 : i32 to vector<8x1xi32>
    %317 = arith.subi %286, %316 : vector<8x1xi32>
    %c1_i32_84 = arith.constant 1 : i32
    %318 = vector.broadcast %c1_i32_84 : i32 to vector<8x1xi32>
    %319 = arith.subi %281, %318 : vector<8x1xi32>
    %320 = arith.select %296, %317, %319 : vector<8x1xi1>, vector<8x1xi32>
    %321 = arith.select %303, %315, %320 : vector<8x1xi1>, vector<8x1xi32>
    %322 = arith.select %310, %275, %321 : vector<8x1xi1>, vector<8x1xi32>
    %c6_i32 = arith.constant 6 : i32
    %323 = arith.subi %322, %313 : vector<8x1xi32>
    %c3_i32_85 = arith.constant 3 : i32
    %324 = vector.broadcast %c3_i32_85 : i32 to vector<8x1xi32>
    %325 = arith.addi %323, %324 : vector<8x1xi32>
    %c2_i32_86 = arith.constant 2 : i32
    %326 = vector.broadcast %c2_i32_86 : i32 to vector<8x1xi32>
    %327 = arith.shrsi %325, %326 : vector<8x1xi32>
    %328 = arith.addi %313, %327 : vector<8x1xi32>
    %c1_i32_87 = arith.constant 1 : i32
    %329 = vector.broadcast %c1_i32_87 : i32 to vector<8x1xi32>
    %330 = arith.addi %323, %329 : vector<8x1xi32>
    %c1_i32_88 = arith.constant 1 : i32
    %331 = vector.broadcast %c1_i32_88 : i32 to vector<8x1xi32>
    %332 = arith.shrsi %330, %331 : vector<8x1xi32>
    %333 = arith.addi %313, %332 : vector<8x1xi32>
    %c2_i32_89 = arith.constant 2 : i32
    %334 = vector.broadcast %c2_i32_89 : i32 to vector<8x1xi32>
    %335 = arith.shrsi %323, %334 : vector<8x1xi32>
    %336 = arith.subi %322, %335 : vector<8x1xi32>
    %337 = vector.broadcast %328 : vector<8x1xi32> to vector<8x128xi32>
    %338 = arith.cmpi sge, %38, %337 : vector<8x128xi32>
    %339 = arith.extui %338 : vector<8x128xi1> to vector<8x128xi32>
    %340 = arith.sitofp %339 : vector<8x128xi32> to vector<8x128xf32>
    %cst_90 = arith.constant dense<0.000000e+00> : vector<8xf32>
    %341 = vector.multi_reduction <add>, %340, %cst_90 [1] : vector<8x128xf32> to vector<8xf32>
    %342 = vector.shape_cast %341 : vector<8xf32> to vector<8x1xf32>
    %343 = arith.cmpf oge, %342, %35 : vector<8x1xf32>
    %344 = vector.broadcast %333 : vector<8x1xi32> to vector<8x128xi32>
    %345 = arith.cmpi sge, %38, %344 : vector<8x128xi32>
    %346 = arith.extui %345 : vector<8x128xi1> to vector<8x128xi32>
    %347 = arith.sitofp %346 : vector<8x128xi32> to vector<8x128xf32>
    %cst_91 = arith.constant dense<0.000000e+00> : vector<8xf32>
    %348 = vector.multi_reduction <add>, %347, %cst_91 [1] : vector<8x128xf32> to vector<8xf32>
    %349 = vector.shape_cast %348 : vector<8xf32> to vector<8x1xf32>
    %350 = arith.cmpf oge, %349, %35 : vector<8x1xf32>
    %351 = vector.broadcast %336 : vector<8x1xi32> to vector<8x128xi32>
    %352 = arith.cmpi sge, %38, %351 : vector<8x128xi32>
    %353 = arith.extui %352 : vector<8x128xi1> to vector<8x128xi32>
    %354 = arith.sitofp %353 : vector<8x128xi32> to vector<8x128xf32>
    %cst_92 = arith.constant dense<0.000000e+00> : vector<8xf32>
    %355 = vector.multi_reduction <add>, %354, %cst_92 [1] : vector<8x128xf32> to vector<8xf32>
    %356 = vector.shape_cast %355 : vector<8xf32> to vector<8x1xf32>
    %357 = arith.cmpf oge, %356, %35 : vector<8x1xf32>
    %358 = arith.select %343, %328, %313 : vector<8x1xi1>, vector<8x1xi32>
    %359 = arith.select %350, %333, %358 : vector<8x1xi1>, vector<8x1xi32>
    %360 = arith.select %357, %336, %359 : vector<8x1xi1>, vector<8x1xi32>
    %c1_i32_93 = arith.constant 1 : i32
    %361 = vector.broadcast %c1_i32_93 : i32 to vector<8x1xi32>
    %362 = arith.subi %336, %361 : vector<8x1xi32>
    %c1_i32_94 = arith.constant 1 : i32
    %363 = vector.broadcast %c1_i32_94 : i32 to vector<8x1xi32>
    %364 = arith.subi %333, %363 : vector<8x1xi32>
    %c1_i32_95 = arith.constant 1 : i32
    %365 = vector.broadcast %c1_i32_95 : i32 to vector<8x1xi32>
    %366 = arith.subi %328, %365 : vector<8x1xi32>
    %367 = arith.select %343, %364, %366 : vector<8x1xi1>, vector<8x1xi32>
    %368 = arith.select %350, %362, %367 : vector<8x1xi1>, vector<8x1xi32>
    %369 = arith.select %357, %322, %368 : vector<8x1xi1>, vector<8x1xi32>
    %c7_i32 = arith.constant 7 : i32
    %370 = arith.subi %369, %360 : vector<8x1xi32>
    %c3_i32_96 = arith.constant 3 : i32
    %371 = vector.broadcast %c3_i32_96 : i32 to vector<8x1xi32>
    %372 = arith.addi %370, %371 : vector<8x1xi32>
    %c2_i32_97 = arith.constant 2 : i32
    %373 = vector.broadcast %c2_i32_97 : i32 to vector<8x1xi32>
    %374 = arith.shrsi %372, %373 : vector<8x1xi32>
    %375 = arith.addi %360, %374 : vector<8x1xi32>
    %c1_i32_98 = arith.constant 1 : i32
    %376 = vector.broadcast %c1_i32_98 : i32 to vector<8x1xi32>
    %377 = arith.addi %370, %376 : vector<8x1xi32>
    %c1_i32_99 = arith.constant 1 : i32
    %378 = vector.broadcast %c1_i32_99 : i32 to vector<8x1xi32>
    %379 = arith.shrsi %377, %378 : vector<8x1xi32>
    %380 = arith.addi %360, %379 : vector<8x1xi32>
    %c2_i32_100 = arith.constant 2 : i32
    %381 = vector.broadcast %c2_i32_100 : i32 to vector<8x1xi32>
    %382 = arith.shrsi %370, %381 : vector<8x1xi32>
    %383 = arith.subi %369, %382 : vector<8x1xi32>
    %384 = vector.broadcast %375 : vector<8x1xi32> to vector<8x128xi32>
    %385 = arith.cmpi sge, %38, %384 : vector<8x128xi32>
    %386 = arith.extui %385 : vector<8x128xi1> to vector<8x128xi32>
    %387 = arith.sitofp %386 : vector<8x128xi32> to vector<8x128xf32>
    %cst_101 = arith.constant dense<0.000000e+00> : vector<8xf32>
    %388 = vector.multi_reduction <add>, %387, %cst_101 [1] : vector<8x128xf32> to vector<8xf32>
    %389 = vector.shape_cast %388 : vector<8xf32> to vector<8x1xf32>
    %390 = arith.cmpf oge, %389, %35 : vector<8x1xf32>
    %391 = vector.broadcast %380 : vector<8x1xi32> to vector<8x128xi32>
    %392 = arith.cmpi sge, %38, %391 : vector<8x128xi32>
    %393 = arith.extui %392 : vector<8x128xi1> to vector<8x128xi32>
    %394 = arith.sitofp %393 : vector<8x128xi32> to vector<8x128xf32>
    %cst_102 = arith.constant dense<0.000000e+00> : vector<8xf32>
    %395 = vector.multi_reduction <add>, %394, %cst_102 [1] : vector<8x128xf32> to vector<8xf32>
    %396 = vector.shape_cast %395 : vector<8xf32> to vector<8x1xf32>
    %397 = arith.cmpf oge, %396, %35 : vector<8x1xf32>
    %398 = vector.broadcast %383 : vector<8x1xi32> to vector<8x128xi32>
    %399 = arith.cmpi sge, %38, %398 : vector<8x128xi32>
    %400 = arith.extui %399 : vector<8x128xi1> to vector<8x128xi32>
    %401 = arith.sitofp %400 : vector<8x128xi32> to vector<8x128xf32>
    %cst_103 = arith.constant dense<0.000000e+00> : vector<8xf32>
    %402 = vector.multi_reduction <add>, %401, %cst_103 [1] : vector<8x128xf32> to vector<8xf32>
    %403 = vector.shape_cast %402 : vector<8xf32> to vector<8x1xf32>
    %404 = arith.cmpf oge, %403, %35 : vector<8x1xf32>
    %405 = arith.select %390, %375, %360 : vector<8x1xi1>, vector<8x1xi32>
    %406 = arith.select %397, %380, %405 : vector<8x1xi1>, vector<8x1xi32>
    %407 = arith.select %404, %383, %406 : vector<8x1xi1>, vector<8x1xi32>
    %c1_i32_104 = arith.constant 1 : i32
    %408 = vector.broadcast %c1_i32_104 : i32 to vector<8x1xi32>
    %409 = arith.subi %383, %408 : vector<8x1xi32>
    %c1_i32_105 = arith.constant 1 : i32
    %410 = vector.broadcast %c1_i32_105 : i32 to vector<8x1xi32>
    %411 = arith.subi %380, %410 : vector<8x1xi32>
    %c1_i32_106 = arith.constant 1 : i32
    %412 = vector.broadcast %c1_i32_106 : i32 to vector<8x1xi32>
    %413 = arith.subi %375, %412 : vector<8x1xi32>
    %414 = arith.select %390, %411, %413 : vector<8x1xi1>, vector<8x1xi32>
    %415 = arith.select %397, %409, %414 : vector<8x1xi1>, vector<8x1xi32>
    %416 = arith.select %404, %369, %415 : vector<8x1xi1>, vector<8x1xi32>
    %c8_i32 = arith.constant 8 : i32
    %417 = arith.subi %416, %407 : vector<8x1xi32>
    %c3_i32_107 = arith.constant 3 : i32
    %418 = vector.broadcast %c3_i32_107 : i32 to vector<8x1xi32>
    %419 = arith.addi %417, %418 : vector<8x1xi32>
    %c2_i32_108 = arith.constant 2 : i32
    %420 = vector.broadcast %c2_i32_108 : i32 to vector<8x1xi32>
    %421 = arith.shrsi %419, %420 : vector<8x1xi32>
    %422 = arith.addi %407, %421 : vector<8x1xi32>
    %c1_i32_109 = arith.constant 1 : i32
    %423 = vector.broadcast %c1_i32_109 : i32 to vector<8x1xi32>
    %424 = arith.addi %417, %423 : vector<8x1xi32>
    %c1_i32_110 = arith.constant 1 : i32
    %425 = vector.broadcast %c1_i32_110 : i32 to vector<8x1xi32>
    %426 = arith.shrsi %424, %425 : vector<8x1xi32>
    %427 = arith.addi %407, %426 : vector<8x1xi32>
    %c2_i32_111 = arith.constant 2 : i32
    %428 = vector.broadcast %c2_i32_111 : i32 to vector<8x1xi32>
    %429 = arith.shrsi %417, %428 : vector<8x1xi32>
    %430 = arith.subi %416, %429 : vector<8x1xi32>
    %431 = vector.broadcast %422 : vector<8x1xi32> to vector<8x128xi32>
    %432 = arith.cmpi sge, %38, %431 : vector<8x128xi32>
    %433 = arith.extui %432 : vector<8x128xi1> to vector<8x128xi32>
    %434 = arith.sitofp %433 : vector<8x128xi32> to vector<8x128xf32>
    %cst_112 = arith.constant dense<0.000000e+00> : vector<8xf32>
    %435 = vector.multi_reduction <add>, %434, %cst_112 [1] : vector<8x128xf32> to vector<8xf32>
    %436 = vector.shape_cast %435 : vector<8xf32> to vector<8x1xf32>
    %437 = arith.cmpf oge, %436, %35 : vector<8x1xf32>
    %438 = vector.broadcast %427 : vector<8x1xi32> to vector<8x128xi32>
    %439 = arith.cmpi sge, %38, %438 : vector<8x128xi32>
    %440 = arith.extui %439 : vector<8x128xi1> to vector<8x128xi32>
    %441 = arith.sitofp %440 : vector<8x128xi32> to vector<8x128xf32>
    %cst_113 = arith.constant dense<0.000000e+00> : vector<8xf32>
    %442 = vector.multi_reduction <add>, %441, %cst_113 [1] : vector<8x128xf32> to vector<8xf32>
    %443 = vector.shape_cast %442 : vector<8xf32> to vector<8x1xf32>
    %444 = arith.cmpf oge, %443, %35 : vector<8x1xf32>
    %445 = vector.broadcast %430 : vector<8x1xi32> to vector<8x128xi32>
    %446 = arith.cmpi sge, %38, %445 : vector<8x128xi32>
    %447 = arith.extui %446 : vector<8x128xi1> to vector<8x128xi32>
    %448 = arith.sitofp %447 : vector<8x128xi32> to vector<8x128xf32>
    %cst_114 = arith.constant dense<0.000000e+00> : vector<8xf32>
    %449 = vector.multi_reduction <add>, %448, %cst_114 [1] : vector<8x128xf32> to vector<8xf32>
    %450 = vector.shape_cast %449 : vector<8xf32> to vector<8x1xf32>
    %451 = arith.cmpf oge, %450, %35 : vector<8x1xf32>
    %452 = arith.select %437, %422, %407 : vector<8x1xi1>, vector<8x1xi32>
    %453 = arith.select %444, %427, %452 : vector<8x1xi1>, vector<8x1xi32>
    %454 = arith.select %451, %430, %453 : vector<8x1xi1>, vector<8x1xi32>
    %c1_i32_115 = arith.constant 1 : i32
    %455 = vector.broadcast %c1_i32_115 : i32 to vector<8x1xi32>
    %456 = arith.subi %430, %455 : vector<8x1xi32>
    %c1_i32_116 = arith.constant 1 : i32
    %457 = vector.broadcast %c1_i32_116 : i32 to vector<8x1xi32>
    %458 = arith.subi %427, %457 : vector<8x1xi32>
    %c1_i32_117 = arith.constant 1 : i32
    %459 = vector.broadcast %c1_i32_117 : i32 to vector<8x1xi32>
    %460 = arith.subi %422, %459 : vector<8x1xi32>
    %461 = arith.select %437, %458, %460 : vector<8x1xi1>, vector<8x1xi32>
    %462 = arith.select %444, %456, %461 : vector<8x1xi1>, vector<8x1xi32>
    %463 = arith.select %451, %416, %462 : vector<8x1xi1>, vector<8x1xi32>
    %c9_i32 = arith.constant 9 : i32
    %464 = arith.subi %463, %454 : vector<8x1xi32>
    %c3_i32_118 = arith.constant 3 : i32
    %465 = vector.broadcast %c3_i32_118 : i32 to vector<8x1xi32>
    %466 = arith.addi %464, %465 : vector<8x1xi32>
    %c2_i32_119 = arith.constant 2 : i32
    %467 = vector.broadcast %c2_i32_119 : i32 to vector<8x1xi32>
    %468 = arith.shrsi %466, %467 : vector<8x1xi32>
    %469 = arith.addi %454, %468 : vector<8x1xi32>
    %c1_i32_120 = arith.constant 1 : i32
    %470 = vector.broadcast %c1_i32_120 : i32 to vector<8x1xi32>
    %471 = arith.addi %464, %470 : vector<8x1xi32>
    %c1_i32_121 = arith.constant 1 : i32
    %472 = vector.broadcast %c1_i32_121 : i32 to vector<8x1xi32>
    %473 = arith.shrsi %471, %472 : vector<8x1xi32>
    %474 = arith.addi %454, %473 : vector<8x1xi32>
    %c2_i32_122 = arith.constant 2 : i32
    %475 = vector.broadcast %c2_i32_122 : i32 to vector<8x1xi32>
    %476 = arith.shrsi %464, %475 : vector<8x1xi32>
    %477 = arith.subi %463, %476 : vector<8x1xi32>
    %478 = vector.broadcast %469 : vector<8x1xi32> to vector<8x128xi32>
    %479 = arith.cmpi sge, %38, %478 : vector<8x128xi32>
    %480 = arith.extui %479 : vector<8x128xi1> to vector<8x128xi32>
    %481 = arith.sitofp %480 : vector<8x128xi32> to vector<8x128xf32>
    %cst_123 = arith.constant dense<0.000000e+00> : vector<8xf32>
    %482 = vector.multi_reduction <add>, %481, %cst_123 [1] : vector<8x128xf32> to vector<8xf32>
    %483 = vector.shape_cast %482 : vector<8xf32> to vector<8x1xf32>
    %484 = arith.cmpf oge, %483, %35 : vector<8x1xf32>
    %485 = vector.broadcast %474 : vector<8x1xi32> to vector<8x128xi32>
    %486 = arith.cmpi sge, %38, %485 : vector<8x128xi32>
    %487 = arith.extui %486 : vector<8x128xi1> to vector<8x128xi32>
    %488 = arith.sitofp %487 : vector<8x128xi32> to vector<8x128xf32>
    %cst_124 = arith.constant dense<0.000000e+00> : vector<8xf32>
    %489 = vector.multi_reduction <add>, %488, %cst_124 [1] : vector<8x128xf32> to vector<8xf32>
    %490 = vector.shape_cast %489 : vector<8xf32> to vector<8x1xf32>
    %491 = arith.cmpf oge, %490, %35 : vector<8x1xf32>
    %492 = vector.broadcast %477 : vector<8x1xi32> to vector<8x128xi32>
    %493 = arith.cmpi sge, %38, %492 : vector<8x128xi32>
    %494 = arith.extui %493 : vector<8x128xi1> to vector<8x128xi32>
    %495 = arith.sitofp %494 : vector<8x128xi32> to vector<8x128xf32>
    %cst_125 = arith.constant dense<0.000000e+00> : vector<8xf32>
    %496 = vector.multi_reduction <add>, %495, %cst_125 [1] : vector<8x128xf32> to vector<8xf32>
    %497 = vector.shape_cast %496 : vector<8xf32> to vector<8x1xf32>
    %498 = arith.cmpf oge, %497, %35 : vector<8x1xf32>
    %499 = arith.select %484, %469, %454 : vector<8x1xi1>, vector<8x1xi32>
    %500 = arith.select %491, %474, %499 : vector<8x1xi1>, vector<8x1xi32>
    %501 = arith.select %498, %477, %500 : vector<8x1xi1>, vector<8x1xi32>
    %c1_i32_126 = arith.constant 1 : i32
    %502 = vector.broadcast %c1_i32_126 : i32 to vector<8x1xi32>
    %503 = arith.subi %477, %502 : vector<8x1xi32>
    %c1_i32_127 = arith.constant 1 : i32
    %504 = vector.broadcast %c1_i32_127 : i32 to vector<8x1xi32>
    %505 = arith.subi %474, %504 : vector<8x1xi32>
    %c1_i32_128 = arith.constant 1 : i32
    %506 = vector.broadcast %c1_i32_128 : i32 to vector<8x1xi32>
    %507 = arith.subi %469, %506 : vector<8x1xi32>
    %508 = arith.select %484, %505, %507 : vector<8x1xi1>, vector<8x1xi32>
    %509 = arith.select %491, %503, %508 : vector<8x1xi1>, vector<8x1xi32>
    %510 = arith.select %498, %463, %509 : vector<8x1xi1>, vector<8x1xi32>
    %c10_i32 = arith.constant 10 : i32
    %511 = arith.subi %510, %501 : vector<8x1xi32>
    %c3_i32_129 = arith.constant 3 : i32
    %512 = vector.broadcast %c3_i32_129 : i32 to vector<8x1xi32>
    %513 = arith.addi %511, %512 : vector<8x1xi32>
    %c2_i32_130 = arith.constant 2 : i32
    %514 = vector.broadcast %c2_i32_130 : i32 to vector<8x1xi32>
    %515 = arith.shrsi %513, %514 : vector<8x1xi32>
    %516 = arith.addi %501, %515 : vector<8x1xi32>
    %c1_i32_131 = arith.constant 1 : i32
    %517 = vector.broadcast %c1_i32_131 : i32 to vector<8x1xi32>
    %518 = arith.addi %511, %517 : vector<8x1xi32>
    %c1_i32_132 = arith.constant 1 : i32
    %519 = vector.broadcast %c1_i32_132 : i32 to vector<8x1xi32>
    %520 = arith.shrsi %518, %519 : vector<8x1xi32>
    %521 = arith.addi %501, %520 : vector<8x1xi32>
    %c2_i32_133 = arith.constant 2 : i32
    %522 = vector.broadcast %c2_i32_133 : i32 to vector<8x1xi32>
    %523 = arith.shrsi %511, %522 : vector<8x1xi32>
    %524 = arith.subi %510, %523 : vector<8x1xi32>
    %525 = vector.broadcast %516 : vector<8x1xi32> to vector<8x128xi32>
    %526 = arith.cmpi sge, %38, %525 : vector<8x128xi32>
    %527 = arith.extui %526 : vector<8x128xi1> to vector<8x128xi32>
    %528 = arith.sitofp %527 : vector<8x128xi32> to vector<8x128xf32>
    %cst_134 = arith.constant dense<0.000000e+00> : vector<8xf32>
    %529 = vector.multi_reduction <add>, %528, %cst_134 [1] : vector<8x128xf32> to vector<8xf32>
    %530 = vector.shape_cast %529 : vector<8xf32> to vector<8x1xf32>
    %531 = arith.cmpf oge, %530, %35 : vector<8x1xf32>
    %532 = vector.broadcast %521 : vector<8x1xi32> to vector<8x128xi32>
    %533 = arith.cmpi sge, %38, %532 : vector<8x128xi32>
    %534 = arith.extui %533 : vector<8x128xi1> to vector<8x128xi32>
    %535 = arith.sitofp %534 : vector<8x128xi32> to vector<8x128xf32>
    %cst_135 = arith.constant dense<0.000000e+00> : vector<8xf32>
    %536 = vector.multi_reduction <add>, %535, %cst_135 [1] : vector<8x128xf32> to vector<8xf32>
    %537 = vector.shape_cast %536 : vector<8xf32> to vector<8x1xf32>
    %538 = arith.cmpf oge, %537, %35 : vector<8x1xf32>
    %539 = vector.broadcast %524 : vector<8x1xi32> to vector<8x128xi32>
    %540 = arith.cmpi sge, %38, %539 : vector<8x128xi32>
    %541 = arith.extui %540 : vector<8x128xi1> to vector<8x128xi32>
    %542 = arith.sitofp %541 : vector<8x128xi32> to vector<8x128xf32>
    %cst_136 = arith.constant dense<0.000000e+00> : vector<8xf32>
    %543 = vector.multi_reduction <add>, %542, %cst_136 [1] : vector<8x128xf32> to vector<8xf32>
    %544 = vector.shape_cast %543 : vector<8xf32> to vector<8x1xf32>
    %545 = arith.cmpf oge, %544, %35 : vector<8x1xf32>
    %546 = arith.select %531, %516, %501 : vector<8x1xi1>, vector<8x1xi32>
    %547 = arith.select %538, %521, %546 : vector<8x1xi1>, vector<8x1xi32>
    %548 = arith.select %545, %524, %547 : vector<8x1xi1>, vector<8x1xi32>
    %c1_i32_137 = arith.constant 1 : i32
    %549 = vector.broadcast %c1_i32_137 : i32 to vector<8x1xi32>
    %550 = arith.subi %524, %549 : vector<8x1xi32>
    %c1_i32_138 = arith.constant 1 : i32
    %551 = vector.broadcast %c1_i32_138 : i32 to vector<8x1xi32>
    %552 = arith.subi %521, %551 : vector<8x1xi32>
    %c1_i32_139 = arith.constant 1 : i32
    %553 = vector.broadcast %c1_i32_139 : i32 to vector<8x1xi32>
    %554 = arith.subi %516, %553 : vector<8x1xi32>
    %555 = arith.select %531, %552, %554 : vector<8x1xi1>, vector<8x1xi32>
    %556 = arith.select %538, %550, %555 : vector<8x1xi1>, vector<8x1xi32>
    %557 = arith.select %545, %510, %556 : vector<8x1xi1>, vector<8x1xi32>
    %c11_i32 = arith.constant 11 : i32
    %558 = arith.subi %557, %548 : vector<8x1xi32>
    %c3_i32_140 = arith.constant 3 : i32
    %559 = vector.broadcast %c3_i32_140 : i32 to vector<8x1xi32>
    %560 = arith.addi %558, %559 : vector<8x1xi32>
    %c2_i32_141 = arith.constant 2 : i32
    %561 = vector.broadcast %c2_i32_141 : i32 to vector<8x1xi32>
    %562 = arith.shrsi %560, %561 : vector<8x1xi32>
    %563 = arith.addi %548, %562 : vector<8x1xi32>
    %c1_i32_142 = arith.constant 1 : i32
    %564 = vector.broadcast %c1_i32_142 : i32 to vector<8x1xi32>
    %565 = arith.addi %558, %564 : vector<8x1xi32>
    %c1_i32_143 = arith.constant 1 : i32
    %566 = vector.broadcast %c1_i32_143 : i32 to vector<8x1xi32>
    %567 = arith.shrsi %565, %566 : vector<8x1xi32>
    %568 = arith.addi %548, %567 : vector<8x1xi32>
    %c2_i32_144 = arith.constant 2 : i32
    %569 = vector.broadcast %c2_i32_144 : i32 to vector<8x1xi32>
    %570 = arith.shrsi %558, %569 : vector<8x1xi32>
    %571 = arith.subi %557, %570 : vector<8x1xi32>
    %572 = vector.broadcast %563 : vector<8x1xi32> to vector<8x128xi32>
    %573 = arith.cmpi sge, %38, %572 : vector<8x128xi32>
    %574 = arith.extui %573 : vector<8x128xi1> to vector<8x128xi32>
    %575 = arith.sitofp %574 : vector<8x128xi32> to vector<8x128xf32>
    %cst_145 = arith.constant dense<0.000000e+00> : vector<8xf32>
    %576 = vector.multi_reduction <add>, %575, %cst_145 [1] : vector<8x128xf32> to vector<8xf32>
    %577 = vector.shape_cast %576 : vector<8xf32> to vector<8x1xf32>
    %578 = arith.cmpf oge, %577, %35 : vector<8x1xf32>
    %579 = vector.broadcast %568 : vector<8x1xi32> to vector<8x128xi32>
    %580 = arith.cmpi sge, %38, %579 : vector<8x128xi32>
    %581 = arith.extui %580 : vector<8x128xi1> to vector<8x128xi32>
    %582 = arith.sitofp %581 : vector<8x128xi32> to vector<8x128xf32>
    %cst_146 = arith.constant dense<0.000000e+00> : vector<8xf32>
    %583 = vector.multi_reduction <add>, %582, %cst_146 [1] : vector<8x128xf32> to vector<8xf32>
    %584 = vector.shape_cast %583 : vector<8xf32> to vector<8x1xf32>
    %585 = arith.cmpf oge, %584, %35 : vector<8x1xf32>
    %586 = vector.broadcast %571 : vector<8x1xi32> to vector<8x128xi32>
    %587 = arith.cmpi sge, %38, %586 : vector<8x128xi32>
    %588 = arith.extui %587 : vector<8x128xi1> to vector<8x128xi32>
    %589 = arith.sitofp %588 : vector<8x128xi32> to vector<8x128xf32>
    %cst_147 = arith.constant dense<0.000000e+00> : vector<8xf32>
    %590 = vector.multi_reduction <add>, %589, %cst_147 [1] : vector<8x128xf32> to vector<8xf32>
    %591 = vector.shape_cast %590 : vector<8xf32> to vector<8x1xf32>
    %592 = arith.cmpf oge, %591, %35 : vector<8x1xf32>
    %593 = arith.select %578, %563, %548 : vector<8x1xi1>, vector<8x1xi32>
    %594 = arith.select %585, %568, %593 : vector<8x1xi1>, vector<8x1xi32>
    %595 = arith.select %592, %571, %594 : vector<8x1xi1>, vector<8x1xi32>
    %c1_i32_148 = arith.constant 1 : i32
    %596 = vector.broadcast %c1_i32_148 : i32 to vector<8x1xi32>
    %597 = arith.subi %571, %596 : vector<8x1xi32>
    %c1_i32_149 = arith.constant 1 : i32
    %598 = vector.broadcast %c1_i32_149 : i32 to vector<8x1xi32>
    %599 = arith.subi %568, %598 : vector<8x1xi32>
    %c1_i32_150 = arith.constant 1 : i32
    %600 = vector.broadcast %c1_i32_150 : i32 to vector<8x1xi32>
    %601 = arith.subi %563, %600 : vector<8x1xi32>
    %602 = arith.select %578, %599, %601 : vector<8x1xi1>, vector<8x1xi32>
    %603 = arith.select %585, %597, %602 : vector<8x1xi1>, vector<8x1xi32>
    %604 = arith.select %592, %557, %603 : vector<8x1xi1>, vector<8x1xi32>
    %c12_i32 = arith.constant 12 : i32
    %605 = arith.subi %604, %595 : vector<8x1xi32>
    %c3_i32_151 = arith.constant 3 : i32
    %606 = vector.broadcast %c3_i32_151 : i32 to vector<8x1xi32>
    %607 = arith.addi %605, %606 : vector<8x1xi32>
    %c2_i32_152 = arith.constant 2 : i32
    %608 = vector.broadcast %c2_i32_152 : i32 to vector<8x1xi32>
    %609 = arith.shrsi %607, %608 : vector<8x1xi32>
    %610 = arith.addi %595, %609 : vector<8x1xi32>
    %c1_i32_153 = arith.constant 1 : i32
    %611 = vector.broadcast %c1_i32_153 : i32 to vector<8x1xi32>
    %612 = arith.addi %605, %611 : vector<8x1xi32>
    %c1_i32_154 = arith.constant 1 : i32
    %613 = vector.broadcast %c1_i32_154 : i32 to vector<8x1xi32>
    %614 = arith.shrsi %612, %613 : vector<8x1xi32>
    %615 = arith.addi %595, %614 : vector<8x1xi32>
    %c2_i32_155 = arith.constant 2 : i32
    %616 = vector.broadcast %c2_i32_155 : i32 to vector<8x1xi32>
    %617 = arith.shrsi %605, %616 : vector<8x1xi32>
    %618 = arith.subi %604, %617 : vector<8x1xi32>
    %619 = vector.broadcast %610 : vector<8x1xi32> to vector<8x128xi32>
    %620 = arith.cmpi sge, %38, %619 : vector<8x128xi32>
    %621 = arith.extui %620 : vector<8x128xi1> to vector<8x128xi32>
    %622 = arith.sitofp %621 : vector<8x128xi32> to vector<8x128xf32>
    %cst_156 = arith.constant dense<0.000000e+00> : vector<8xf32>
    %623 = vector.multi_reduction <add>, %622, %cst_156 [1] : vector<8x128xf32> to vector<8xf32>
    %624 = vector.shape_cast %623 : vector<8xf32> to vector<8x1xf32>
    %625 = arith.cmpf oge, %624, %35 : vector<8x1xf32>
    %626 = vector.broadcast %615 : vector<8x1xi32> to vector<8x128xi32>
    %627 = arith.cmpi sge, %38, %626 : vector<8x128xi32>
    %628 = arith.extui %627 : vector<8x128xi1> to vector<8x128xi32>
    %629 = arith.sitofp %628 : vector<8x128xi32> to vector<8x128xf32>
    %cst_157 = arith.constant dense<0.000000e+00> : vector<8xf32>
    %630 = vector.multi_reduction <add>, %629, %cst_157 [1] : vector<8x128xf32> to vector<8xf32>
    %631 = vector.shape_cast %630 : vector<8xf32> to vector<8x1xf32>
    %632 = arith.cmpf oge, %631, %35 : vector<8x1xf32>
    %633 = vector.broadcast %618 : vector<8x1xi32> to vector<8x128xi32>
    %634 = arith.cmpi sge, %38, %633 : vector<8x128xi32>
    %635 = arith.extui %634 : vector<8x128xi1> to vector<8x128xi32>
    %636 = arith.sitofp %635 : vector<8x128xi32> to vector<8x128xf32>
    %cst_158 = arith.constant dense<0.000000e+00> : vector<8xf32>
    %637 = vector.multi_reduction <add>, %636, %cst_158 [1] : vector<8x128xf32> to vector<8xf32>
    %638 = vector.shape_cast %637 : vector<8xf32> to vector<8x1xf32>
    %639 = arith.cmpf oge, %638, %35 : vector<8x1xf32>
    %640 = arith.select %625, %610, %595 : vector<8x1xi1>, vector<8x1xi32>
    %641 = arith.select %632, %615, %640 : vector<8x1xi1>, vector<8x1xi32>
    %642 = arith.select %639, %618, %641 : vector<8x1xi1>, vector<8x1xi32>
    %c1_i32_159 = arith.constant 1 : i32
    %643 = vector.broadcast %c1_i32_159 : i32 to vector<8x1xi32>
    %644 = arith.subi %618, %643 : vector<8x1xi32>
    %c1_i32_160 = arith.constant 1 : i32
    %645 = vector.broadcast %c1_i32_160 : i32 to vector<8x1xi32>
    %646 = arith.subi %615, %645 : vector<8x1xi32>
    %c1_i32_161 = arith.constant 1 : i32
    %647 = vector.broadcast %c1_i32_161 : i32 to vector<8x1xi32>
    %648 = arith.subi %610, %647 : vector<8x1xi32>
    %649 = arith.select %625, %646, %648 : vector<8x1xi1>, vector<8x1xi32>
    %650 = arith.select %632, %644, %649 : vector<8x1xi1>, vector<8x1xi32>
    %651 = arith.select %639, %604, %650 : vector<8x1xi1>, vector<8x1xi32>
    %c13_i32 = arith.constant 13 : i32
    %652 = arith.subi %651, %642 : vector<8x1xi32>
    %c3_i32_162 = arith.constant 3 : i32
    %653 = vector.broadcast %c3_i32_162 : i32 to vector<8x1xi32>
    %654 = arith.addi %652, %653 : vector<8x1xi32>
    %c2_i32_163 = arith.constant 2 : i32
    %655 = vector.broadcast %c2_i32_163 : i32 to vector<8x1xi32>
    %656 = arith.shrsi %654, %655 : vector<8x1xi32>
    %657 = arith.addi %642, %656 : vector<8x1xi32>
    %c1_i32_164 = arith.constant 1 : i32
    %658 = vector.broadcast %c1_i32_164 : i32 to vector<8x1xi32>
    %659 = arith.addi %652, %658 : vector<8x1xi32>
    %c1_i32_165 = arith.constant 1 : i32
    %660 = vector.broadcast %c1_i32_165 : i32 to vector<8x1xi32>
    %661 = arith.shrsi %659, %660 : vector<8x1xi32>
    %662 = arith.addi %642, %661 : vector<8x1xi32>
    %c2_i32_166 = arith.constant 2 : i32
    %663 = vector.broadcast %c2_i32_166 : i32 to vector<8x1xi32>
    %664 = arith.shrsi %652, %663 : vector<8x1xi32>
    %665 = arith.subi %651, %664 : vector<8x1xi32>
    %666 = vector.broadcast %657 : vector<8x1xi32> to vector<8x128xi32>
    %667 = arith.cmpi sge, %38, %666 : vector<8x128xi32>
    %668 = arith.extui %667 : vector<8x128xi1> to vector<8x128xi32>
    %669 = arith.sitofp %668 : vector<8x128xi32> to vector<8x128xf32>
    %cst_167 = arith.constant dense<0.000000e+00> : vector<8xf32>
    %670 = vector.multi_reduction <add>, %669, %cst_167 [1] : vector<8x128xf32> to vector<8xf32>
    %671 = vector.shape_cast %670 : vector<8xf32> to vector<8x1xf32>
    %672 = arith.cmpf oge, %671, %35 : vector<8x1xf32>
    %673 = vector.broadcast %662 : vector<8x1xi32> to vector<8x128xi32>
    %674 = arith.cmpi sge, %38, %673 : vector<8x128xi32>
    %675 = arith.extui %674 : vector<8x128xi1> to vector<8x128xi32>
    %676 = arith.sitofp %675 : vector<8x128xi32> to vector<8x128xf32>
    %cst_168 = arith.constant dense<0.000000e+00> : vector<8xf32>
    %677 = vector.multi_reduction <add>, %676, %cst_168 [1] : vector<8x128xf32> to vector<8xf32>
    %678 = vector.shape_cast %677 : vector<8xf32> to vector<8x1xf32>
    %679 = arith.cmpf oge, %678, %35 : vector<8x1xf32>
    %680 = vector.broadcast %665 : vector<8x1xi32> to vector<8x128xi32>
    %681 = arith.cmpi sge, %38, %680 : vector<8x128xi32>
    %682 = arith.extui %681 : vector<8x128xi1> to vector<8x128xi32>
    %683 = arith.sitofp %682 : vector<8x128xi32> to vector<8x128xf32>
    %cst_169 = arith.constant dense<0.000000e+00> : vector<8xf32>
    %684 = vector.multi_reduction <add>, %683, %cst_169 [1] : vector<8x128xf32> to vector<8xf32>
    %685 = vector.shape_cast %684 : vector<8xf32> to vector<8x1xf32>
    %686 = arith.cmpf oge, %685, %35 : vector<8x1xf32>
    %687 = arith.select %672, %657, %642 : vector<8x1xi1>, vector<8x1xi32>
    %688 = arith.select %679, %662, %687 : vector<8x1xi1>, vector<8x1xi32>
    %689 = arith.select %686, %665, %688 : vector<8x1xi1>, vector<8x1xi32>
    %c1_i32_170 = arith.constant 1 : i32
    %690 = vector.broadcast %c1_i32_170 : i32 to vector<8x1xi32>
    %691 = arith.subi %665, %690 : vector<8x1xi32>
    %c1_i32_171 = arith.constant 1 : i32
    %692 = vector.broadcast %c1_i32_171 : i32 to vector<8x1xi32>
    %693 = arith.subi %662, %692 : vector<8x1xi32>
    %c1_i32_172 = arith.constant 1 : i32
    %694 = vector.broadcast %c1_i32_172 : i32 to vector<8x1xi32>
    %695 = arith.subi %657, %694 : vector<8x1xi32>
    %696 = arith.select %672, %693, %695 : vector<8x1xi1>, vector<8x1xi32>
    %697 = arith.select %679, %691, %696 : vector<8x1xi1>, vector<8x1xi32>
    %698 = arith.select %686, %651, %697 : vector<8x1xi1>, vector<8x1xi32>
    %c14_i32 = arith.constant 14 : i32
    %699 = arith.subi %698, %689 : vector<8x1xi32>
    %c3_i32_173 = arith.constant 3 : i32
    %700 = vector.broadcast %c3_i32_173 : i32 to vector<8x1xi32>
    %701 = arith.addi %699, %700 : vector<8x1xi32>
    %c2_i32_174 = arith.constant 2 : i32
    %702 = vector.broadcast %c2_i32_174 : i32 to vector<8x1xi32>
    %703 = arith.shrsi %701, %702 : vector<8x1xi32>
    %704 = arith.addi %689, %703 : vector<8x1xi32>
    %c1_i32_175 = arith.constant 1 : i32
    %705 = vector.broadcast %c1_i32_175 : i32 to vector<8x1xi32>
    %706 = arith.addi %699, %705 : vector<8x1xi32>
    %c1_i32_176 = arith.constant 1 : i32
    %707 = vector.broadcast %c1_i32_176 : i32 to vector<8x1xi32>
    %708 = arith.shrsi %706, %707 : vector<8x1xi32>
    %709 = arith.addi %689, %708 : vector<8x1xi32>
    %c2_i32_177 = arith.constant 2 : i32
    %710 = vector.broadcast %c2_i32_177 : i32 to vector<8x1xi32>
    %711 = arith.shrsi %699, %710 : vector<8x1xi32>
    %712 = arith.subi %698, %711 : vector<8x1xi32>
    %713 = vector.broadcast %704 : vector<8x1xi32> to vector<8x128xi32>
    %714 = arith.cmpi sge, %38, %713 : vector<8x128xi32>
    %715 = arith.extui %714 : vector<8x128xi1> to vector<8x128xi32>
    %716 = arith.sitofp %715 : vector<8x128xi32> to vector<8x128xf32>
    %cst_178 = arith.constant dense<0.000000e+00> : vector<8xf32>
    %717 = vector.multi_reduction <add>, %716, %cst_178 [1] : vector<8x128xf32> to vector<8xf32>
    %718 = vector.shape_cast %717 : vector<8xf32> to vector<8x1xf32>
    %719 = arith.cmpf oge, %718, %35 : vector<8x1xf32>
    %720 = vector.broadcast %709 : vector<8x1xi32> to vector<8x128xi32>
    %721 = arith.cmpi sge, %38, %720 : vector<8x128xi32>
    %722 = arith.extui %721 : vector<8x128xi1> to vector<8x128xi32>
    %723 = arith.sitofp %722 : vector<8x128xi32> to vector<8x128xf32>
    %cst_179 = arith.constant dense<0.000000e+00> : vector<8xf32>
    %724 = vector.multi_reduction <add>, %723, %cst_179 [1] : vector<8x128xf32> to vector<8xf32>
    %725 = vector.shape_cast %724 : vector<8xf32> to vector<8x1xf32>
    %726 = arith.cmpf oge, %725, %35 : vector<8x1xf32>
    %727 = vector.broadcast %712 : vector<8x1xi32> to vector<8x128xi32>
    %728 = arith.cmpi sge, %38, %727 : vector<8x128xi32>
    %729 = arith.extui %728 : vector<8x128xi1> to vector<8x128xi32>
    %730 = arith.sitofp %729 : vector<8x128xi32> to vector<8x128xf32>
    %cst_180 = arith.constant dense<0.000000e+00> : vector<8xf32>
    %731 = vector.multi_reduction <add>, %730, %cst_180 [1] : vector<8x128xf32> to vector<8xf32>
    %732 = vector.shape_cast %731 : vector<8xf32> to vector<8x1xf32>
    %733 = arith.cmpf oge, %732, %35 : vector<8x1xf32>
    %734 = arith.select %719, %704, %689 : vector<8x1xi1>, vector<8x1xi32>
    %735 = arith.select %726, %709, %734 : vector<8x1xi1>, vector<8x1xi32>
    %736 = arith.select %733, %712, %735 : vector<8x1xi1>, vector<8x1xi32>
    %c1_i32_181 = arith.constant 1 : i32
    %737 = vector.broadcast %c1_i32_181 : i32 to vector<8x1xi32>
    %738 = arith.subi %712, %737 : vector<8x1xi32>
    %c1_i32_182 = arith.constant 1 : i32
    %739 = vector.broadcast %c1_i32_182 : i32 to vector<8x1xi32>
    %740 = arith.subi %709, %739 : vector<8x1xi32>
    %c1_i32_183 = arith.constant 1 : i32
    %741 = vector.broadcast %c1_i32_183 : i32 to vector<8x1xi32>
    %742 = arith.subi %704, %741 : vector<8x1xi32>
    %743 = arith.select %719, %740, %742 : vector<8x1xi1>, vector<8x1xi32>
    %744 = arith.select %726, %738, %743 : vector<8x1xi1>, vector<8x1xi32>
    %745 = arith.select %733, %698, %744 : vector<8x1xi1>, vector<8x1xi32>
    %c15_i32 = arith.constant 15 : i32
    %746 = arith.subi %745, %736 : vector<8x1xi32>
    %c3_i32_184 = arith.constant 3 : i32
    %747 = vector.broadcast %c3_i32_184 : i32 to vector<8x1xi32>
    %748 = arith.addi %746, %747 : vector<8x1xi32>
    %c2_i32_185 = arith.constant 2 : i32
    %749 = vector.broadcast %c2_i32_185 : i32 to vector<8x1xi32>
    %750 = arith.shrsi %748, %749 : vector<8x1xi32>
    %751 = arith.addi %736, %750 : vector<8x1xi32>
    %c1_i32_186 = arith.constant 1 : i32
    %752 = vector.broadcast %c1_i32_186 : i32 to vector<8x1xi32>
    %753 = arith.addi %746, %752 : vector<8x1xi32>
    %c1_i32_187 = arith.constant 1 : i32
    %754 = vector.broadcast %c1_i32_187 : i32 to vector<8x1xi32>
    %755 = arith.shrsi %753, %754 : vector<8x1xi32>
    %756 = arith.addi %736, %755 : vector<8x1xi32>
    %c2_i32_188 = arith.constant 2 : i32
    %757 = vector.broadcast %c2_i32_188 : i32 to vector<8x1xi32>
    %758 = arith.shrsi %746, %757 : vector<8x1xi32>
    %759 = arith.subi %745, %758 : vector<8x1xi32>
    %760 = vector.broadcast %751 : vector<8x1xi32> to vector<8x128xi32>
    %761 = arith.cmpi sge, %38, %760 : vector<8x128xi32>
    %762 = arith.extui %761 : vector<8x128xi1> to vector<8x128xi32>
    %763 = arith.sitofp %762 : vector<8x128xi32> to vector<8x128xf32>
    %cst_189 = arith.constant dense<0.000000e+00> : vector<8xf32>
    %764 = vector.multi_reduction <add>, %763, %cst_189 [1] : vector<8x128xf32> to vector<8xf32>
    %765 = vector.shape_cast %764 : vector<8xf32> to vector<8x1xf32>
    %766 = arith.cmpf oge, %765, %35 : vector<8x1xf32>
    %767 = vector.broadcast %756 : vector<8x1xi32> to vector<8x128xi32>
    %768 = arith.cmpi sge, %38, %767 : vector<8x128xi32>
    %769 = arith.extui %768 : vector<8x128xi1> to vector<8x128xi32>
    %770 = arith.sitofp %769 : vector<8x128xi32> to vector<8x128xf32>
    %cst_190 = arith.constant dense<0.000000e+00> : vector<8xf32>
    %771 = vector.multi_reduction <add>, %770, %cst_190 [1] : vector<8x128xf32> to vector<8xf32>
    %772 = vector.shape_cast %771 : vector<8xf32> to vector<8x1xf32>
    %773 = arith.cmpf oge, %772, %35 : vector<8x1xf32>
    %774 = vector.broadcast %759 : vector<8x1xi32> to vector<8x128xi32>
    %775 = arith.cmpi sge, %38, %774 : vector<8x128xi32>
    %776 = arith.extui %775 : vector<8x128xi1> to vector<8x128xi32>
    %777 = arith.sitofp %776 : vector<8x128xi32> to vector<8x128xf32>
    %cst_191 = arith.constant dense<0.000000e+00> : vector<8xf32>
    %778 = vector.multi_reduction <add>, %777, %cst_191 [1] : vector<8x128xf32> to vector<8xf32>
    %779 = vector.shape_cast %778 : vector<8xf32> to vector<8x1xf32>
    %780 = arith.cmpf oge, %779, %35 : vector<8x1xf32>
    %781 = arith.select %766, %751, %736 : vector<8x1xi1>, vector<8x1xi32>
    %782 = arith.select %773, %756, %781 : vector<8x1xi1>, vector<8x1xi32>
    %783 = arith.select %780, %759, %782 : vector<8x1xi1>, vector<8x1xi32>
    %c1_i32_192 = arith.constant 1 : i32
    %784 = vector.broadcast %c1_i32_192 : i32 to vector<8x1xi32>
    %785 = arith.subi %759, %784 : vector<8x1xi32>
    %c1_i32_193 = arith.constant 1 : i32
    %786 = vector.broadcast %c1_i32_193 : i32 to vector<8x1xi32>
    %787 = arith.subi %756, %786 : vector<8x1xi32>
    %c1_i32_194 = arith.constant 1 : i32
    %788 = vector.broadcast %c1_i32_194 : i32 to vector<8x1xi32>
    %789 = arith.subi %751, %788 : vector<8x1xi32>
    %790 = arith.select %766, %787, %789 : vector<8x1xi1>, vector<8x1xi32>
    %791 = arith.select %773, %785, %790 : vector<8x1xi1>, vector<8x1xi32>
    %792 = arith.select %780, %745, %791 : vector<8x1xi1>, vector<8x1xi32>
    %c16_i32 = arith.constant 16 : i32
    %793 = arith.subi %792, %783 : vector<8x1xi32>
    %c3_i32_195 = arith.constant 3 : i32
    %794 = vector.broadcast %c3_i32_195 : i32 to vector<8x1xi32>
    %795 = arith.addi %793, %794 : vector<8x1xi32>
    %c2_i32_196 = arith.constant 2 : i32
    %796 = vector.broadcast %c2_i32_196 : i32 to vector<8x1xi32>
    %797 = arith.shrsi %795, %796 : vector<8x1xi32>
    %798 = arith.addi %783, %797 : vector<8x1xi32>
    %c1_i32_197 = arith.constant 1 : i32
    %799 = vector.broadcast %c1_i32_197 : i32 to vector<8x1xi32>
    %800 = arith.addi %793, %799 : vector<8x1xi32>
    %c1_i32_198 = arith.constant 1 : i32
    %801 = vector.broadcast %c1_i32_198 : i32 to vector<8x1xi32>
    %802 = arith.shrsi %800, %801 : vector<8x1xi32>
    %803 = arith.addi %783, %802 : vector<8x1xi32>
    %c2_i32_199 = arith.constant 2 : i32
    %804 = vector.broadcast %c2_i32_199 : i32 to vector<8x1xi32>
    %805 = arith.shrsi %793, %804 : vector<8x1xi32>
    %806 = arith.subi %792, %805 : vector<8x1xi32>
    %807 = vector.broadcast %798 : vector<8x1xi32> to vector<8x128xi32>
    %808 = arith.cmpi sge, %38, %807 : vector<8x128xi32>
    %809 = arith.extui %808 : vector<8x128xi1> to vector<8x128xi32>
    %810 = arith.sitofp %809 : vector<8x128xi32> to vector<8x128xf32>
    %cst_200 = arith.constant dense<0.000000e+00> : vector<8xf32>
    %811 = vector.multi_reduction <add>, %810, %cst_200 [1] : vector<8x128xf32> to vector<8xf32>
    %812 = vector.shape_cast %811 : vector<8xf32> to vector<8x1xf32>
    %813 = arith.cmpf oge, %812, %35 : vector<8x1xf32>
    %814 = vector.broadcast %803 : vector<8x1xi32> to vector<8x128xi32>
    %815 = arith.cmpi sge, %38, %814 : vector<8x128xi32>
    %816 = arith.extui %815 : vector<8x128xi1> to vector<8x128xi32>
    %817 = arith.sitofp %816 : vector<8x128xi32> to vector<8x128xf32>
    %cst_201 = arith.constant dense<0.000000e+00> : vector<8xf32>
    %818 = vector.multi_reduction <add>, %817, %cst_201 [1] : vector<8x128xf32> to vector<8xf32>
    %819 = vector.shape_cast %818 : vector<8xf32> to vector<8x1xf32>
    %820 = arith.cmpf oge, %819, %35 : vector<8x1xf32>
    %821 = vector.broadcast %806 : vector<8x1xi32> to vector<8x128xi32>
    %822 = arith.cmpi sge, %38, %821 : vector<8x128xi32>
    %823 = arith.extui %822 : vector<8x128xi1> to vector<8x128xi32>
    %824 = arith.sitofp %823 : vector<8x128xi32> to vector<8x128xf32>
    %cst_202 = arith.constant dense<0.000000e+00> : vector<8xf32>
    %825 = vector.multi_reduction <add>, %824, %cst_202 [1] : vector<8x128xf32> to vector<8xf32>
    %826 = vector.shape_cast %825 : vector<8xf32> to vector<8x1xf32>
    %827 = arith.cmpf oge, %826, %35 : vector<8x1xf32>
    %828 = arith.select %813, %798, %783 : vector<8x1xi1>, vector<8x1xi32>
    %829 = arith.select %820, %803, %828 : vector<8x1xi1>, vector<8x1xi32>
    %830 = arith.select %827, %806, %829 : vector<8x1xi1>, vector<8x1xi32>
    %c1_i32_203 = arith.constant 1 : i32
    %831 = vector.broadcast %c1_i32_203 : i32 to vector<8x1xi32>
    %832 = arith.subi %806, %831 : vector<8x1xi32>
    %c1_i32_204 = arith.constant 1 : i32
    %833 = vector.broadcast %c1_i32_204 : i32 to vector<8x1xi32>
    %834 = arith.subi %803, %833 : vector<8x1xi32>
    %c1_i32_205 = arith.constant 1 : i32
    %835 = vector.broadcast %c1_i32_205 : i32 to vector<8x1xi32>
    %836 = arith.subi %798, %835 : vector<8x1xi32>
    %837 = arith.select %813, %834, %836 : vector<8x1xi1>, vector<8x1xi32>
    %838 = arith.select %820, %832, %837 : vector<8x1xi1>, vector<8x1xi32>
    %839 = arith.select %827, %792, %838 : vector<8x1xi1>, vector<8x1xi32>
    %840 = vector.broadcast %830 : vector<8x1xi32> to vector<8x128xi32>
    %841 = arith.cmpi sgt, %38, %840 : vector<8x128xi32>
    %842 = vector.broadcast %830 : vector<8x1xi32> to vector<8x128xi32>
    %843 = arith.cmpi eq, %38, %842 : vector<8x128xi32>
    %844 = arith.extui %841 : vector<8x128xi1> to vector<8x128xi32>
    %845 = arith.sitofp %844 : vector<8x128xi32> to vector<8x128xf32>
    %cst_206 = arith.constant dense<0.000000e+00> : vector<8xf32>
    %846 = vector.multi_reduction <add>, %845, %cst_206 [1] : vector<8x128xf32> to vector<8xf32>
    %847 = vector.shape_cast %846 : vector<8xf32> to vector<8x1xf32>
    %848 = arith.subf %35, %847 : vector<8x1xf32>
    %c128_i32 = arith.constant 128 : i32
    %849 = vector.broadcast %c128_i32 : i32 to vector<8x128xi32>
    %850 = arith.select %843, %4, %849 : vector<8x128xi1>, vector<8x128xi32>
    %c0_i32_207 = arith.constant 0 : i32
    %851 = vector.broadcast %c0_i32_207 : i32 to vector<8x1xi32>
    %c128_i32_208 = arith.constant 128 : i32
    %852 = vector.broadcast %c128_i32_208 : i32 to vector<8x1xi32>
    %c0_i32_209 = arith.constant 0 : i32
    %853 = arith.subi %852, %851 : vector<8x1xi32>
    %c2_i32_210 = arith.constant 2 : i32
    %854 = vector.broadcast %c2_i32_210 : i32 to vector<8x1xi32>
    %855 = arith.shrsi %853, %854 : vector<8x1xi32>
    %856 = arith.addi %851, %855 : vector<8x1xi32>
    %c1_i32_211 = arith.constant 1 : i32
    %857 = vector.broadcast %c1_i32_211 : i32 to vector<8x1xi32>
    %858 = arith.shrsi %853, %857 : vector<8x1xi32>
    %859 = arith.addi %851, %858 : vector<8x1xi32>
    %c3_i32_212 = arith.constant 3 : i32
    %860 = vector.broadcast %c3_i32_212 : i32 to vector<8x1xi32>
    %861 = arith.addi %853, %860 : vector<8x1xi32>
    %c2_i32_213 = arith.constant 2 : i32
    %862 = vector.broadcast %c2_i32_213 : i32 to vector<8x1xi32>
    %863 = arith.shrsi %861, %862 : vector<8x1xi32>
    %864 = arith.subi %852, %863 : vector<8x1xi32>
    %865 = vector.broadcast %856 : vector<8x1xi32> to vector<8x128xi32>
    %866 = arith.cmpi slt, %850, %865 : vector<8x128xi32>
    %867 = arith.extui %866 : vector<8x128xi1> to vector<8x128xi32>
    %868 = arith.sitofp %867 : vector<8x128xi32> to vector<8x128xf32>
    %cst_214 = arith.constant dense<0.000000e+00> : vector<8xf32>
    %869 = vector.multi_reduction <add>, %868, %cst_214 [1] : vector<8x128xf32> to vector<8xf32>
    %870 = vector.shape_cast %869 : vector<8xf32> to vector<8x1xf32>
    %871 = arith.cmpf oge, %870, %848 : vector<8x1xf32>
    %872 = vector.broadcast %859 : vector<8x1xi32> to vector<8x128xi32>
    %873 = arith.cmpi slt, %850, %872 : vector<8x128xi32>
    %874 = arith.extui %873 : vector<8x128xi1> to vector<8x128xi32>
    %875 = arith.sitofp %874 : vector<8x128xi32> to vector<8x128xf32>
    %cst_215 = arith.constant dense<0.000000e+00> : vector<8xf32>
    %876 = vector.multi_reduction <add>, %875, %cst_215 [1] : vector<8x128xf32> to vector<8xf32>
    %877 = vector.shape_cast %876 : vector<8xf32> to vector<8x1xf32>
    %878 = arith.cmpf oge, %877, %848 : vector<8x1xf32>
    %879 = vector.broadcast %864 : vector<8x1xi32> to vector<8x128xi32>
    %880 = arith.cmpi slt, %850, %879 : vector<8x128xi32>
    %881 = arith.extui %880 : vector<8x128xi1> to vector<8x128xi32>
    %882 = arith.sitofp %881 : vector<8x128xi32> to vector<8x128xf32>
    %cst_216 = arith.constant dense<0.000000e+00> : vector<8xf32>
    %883 = vector.multi_reduction <add>, %882, %cst_216 [1] : vector<8x128xf32> to vector<8xf32>
    %884 = vector.shape_cast %883 : vector<8xf32> to vector<8x1xf32>
    %885 = arith.cmpf oge, %884, %848 : vector<8x1xf32>
    %886 = arith.select %885, %864, %852 : vector<8x1xi1>, vector<8x1xi32>
    %887 = arith.select %878, %859, %886 : vector<8x1xi1>, vector<8x1xi32>
    %888 = arith.select %871, %856, %887 : vector<8x1xi1>, vector<8x1xi32>
    %c1_i32_217 = arith.constant 1 : i32
    %889 = vector.broadcast %c1_i32_217 : i32 to vector<8x1xi32>
    %890 = arith.addi %856, %889 : vector<8x1xi32>
    %c1_i32_218 = arith.constant 1 : i32
    %891 = vector.broadcast %c1_i32_218 : i32 to vector<8x1xi32>
    %892 = arith.addi %859, %891 : vector<8x1xi32>
    %c1_i32_219 = arith.constant 1 : i32
    %893 = vector.broadcast %c1_i32_219 : i32 to vector<8x1xi32>
    %894 = arith.addi %864, %893 : vector<8x1xi32>
    %895 = arith.select %885, %892, %894 : vector<8x1xi1>, vector<8x1xi32>
    %896 = arith.select %878, %890, %895 : vector<8x1xi1>, vector<8x1xi32>
    %897 = arith.select %871, %851, %896 : vector<8x1xi1>, vector<8x1xi32>
    %c1_i32_220 = arith.constant 1 : i32
    %898 = arith.subi %888, %897 : vector<8x1xi32>
    %c2_i32_221 = arith.constant 2 : i32
    %899 = vector.broadcast %c2_i32_221 : i32 to vector<8x1xi32>
    %900 = arith.shrsi %898, %899 : vector<8x1xi32>
    %901 = arith.addi %897, %900 : vector<8x1xi32>
    %c1_i32_222 = arith.constant 1 : i32
    %902 = vector.broadcast %c1_i32_222 : i32 to vector<8x1xi32>
    %903 = arith.shrsi %898, %902 : vector<8x1xi32>
    %904 = arith.addi %897, %903 : vector<8x1xi32>
    %c3_i32_223 = arith.constant 3 : i32
    %905 = vector.broadcast %c3_i32_223 : i32 to vector<8x1xi32>
    %906 = arith.addi %898, %905 : vector<8x1xi32>
    %c2_i32_224 = arith.constant 2 : i32
    %907 = vector.broadcast %c2_i32_224 : i32 to vector<8x1xi32>
    %908 = arith.shrsi %906, %907 : vector<8x1xi32>
    %909 = arith.subi %888, %908 : vector<8x1xi32>
    %910 = vector.broadcast %901 : vector<8x1xi32> to vector<8x128xi32>
    %911 = arith.cmpi slt, %850, %910 : vector<8x128xi32>
    %912 = arith.extui %911 : vector<8x128xi1> to vector<8x128xi32>
    %913 = arith.sitofp %912 : vector<8x128xi32> to vector<8x128xf32>
    %cst_225 = arith.constant dense<0.000000e+00> : vector<8xf32>
    %914 = vector.multi_reduction <add>, %913, %cst_225 [1] : vector<8x128xf32> to vector<8xf32>
    %915 = vector.shape_cast %914 : vector<8xf32> to vector<8x1xf32>
    %916 = arith.cmpf oge, %915, %848 : vector<8x1xf32>
    %917 = vector.broadcast %904 : vector<8x1xi32> to vector<8x128xi32>
    %918 = arith.cmpi slt, %850, %917 : vector<8x128xi32>
    %919 = arith.extui %918 : vector<8x128xi1> to vector<8x128xi32>
    %920 = arith.sitofp %919 : vector<8x128xi32> to vector<8x128xf32>
    %cst_226 = arith.constant dense<0.000000e+00> : vector<8xf32>
    %921 = vector.multi_reduction <add>, %920, %cst_226 [1] : vector<8x128xf32> to vector<8xf32>
    %922 = vector.shape_cast %921 : vector<8xf32> to vector<8x1xf32>
    %923 = arith.cmpf oge, %922, %848 : vector<8x1xf32>
    %924 = vector.broadcast %909 : vector<8x1xi32> to vector<8x128xi32>
    %925 = arith.cmpi slt, %850, %924 : vector<8x128xi32>
    %926 = arith.extui %925 : vector<8x128xi1> to vector<8x128xi32>
    %927 = arith.sitofp %926 : vector<8x128xi32> to vector<8x128xf32>
    %cst_227 = arith.constant dense<0.000000e+00> : vector<8xf32>
    %928 = vector.multi_reduction <add>, %927, %cst_227 [1] : vector<8x128xf32> to vector<8xf32>
    %929 = vector.shape_cast %928 : vector<8xf32> to vector<8x1xf32>
    %930 = arith.cmpf oge, %929, %848 : vector<8x1xf32>
    %931 = arith.select %930, %909, %888 : vector<8x1xi1>, vector<8x1xi32>
    %932 = arith.select %923, %904, %931 : vector<8x1xi1>, vector<8x1xi32>
    %933 = arith.select %916, %901, %932 : vector<8x1xi1>, vector<8x1xi32>
    %c1_i32_228 = arith.constant 1 : i32
    %934 = vector.broadcast %c1_i32_228 : i32 to vector<8x1xi32>
    %935 = arith.addi %901, %934 : vector<8x1xi32>
    %c1_i32_229 = arith.constant 1 : i32
    %936 = vector.broadcast %c1_i32_229 : i32 to vector<8x1xi32>
    %937 = arith.addi %904, %936 : vector<8x1xi32>
    %c1_i32_230 = arith.constant 1 : i32
    %938 = vector.broadcast %c1_i32_230 : i32 to vector<8x1xi32>
    %939 = arith.addi %909, %938 : vector<8x1xi32>
    %940 = arith.select %930, %937, %939 : vector<8x1xi1>, vector<8x1xi32>
    %941 = arith.select %923, %935, %940 : vector<8x1xi1>, vector<8x1xi32>
    %942 = arith.select %916, %897, %941 : vector<8x1xi1>, vector<8x1xi32>
    %c2_i32_231 = arith.constant 2 : i32
    %943 = arith.subi %933, %942 : vector<8x1xi32>
    %c2_i32_232 = arith.constant 2 : i32
    %944 = vector.broadcast %c2_i32_232 : i32 to vector<8x1xi32>
    %945 = arith.shrsi %943, %944 : vector<8x1xi32>
    %946 = arith.addi %942, %945 : vector<8x1xi32>
    %c1_i32_233 = arith.constant 1 : i32
    %947 = vector.broadcast %c1_i32_233 : i32 to vector<8x1xi32>
    %948 = arith.shrsi %943, %947 : vector<8x1xi32>
    %949 = arith.addi %942, %948 : vector<8x1xi32>
    %c3_i32_234 = arith.constant 3 : i32
    %950 = vector.broadcast %c3_i32_234 : i32 to vector<8x1xi32>
    %951 = arith.addi %943, %950 : vector<8x1xi32>
    %c2_i32_235 = arith.constant 2 : i32
    %952 = vector.broadcast %c2_i32_235 : i32 to vector<8x1xi32>
    %953 = arith.shrsi %951, %952 : vector<8x1xi32>
    %954 = arith.subi %933, %953 : vector<8x1xi32>
    %955 = vector.broadcast %946 : vector<8x1xi32> to vector<8x128xi32>
    %956 = arith.cmpi slt, %850, %955 : vector<8x128xi32>
    %957 = arith.extui %956 : vector<8x128xi1> to vector<8x128xi32>
    %958 = arith.sitofp %957 : vector<8x128xi32> to vector<8x128xf32>
    %cst_236 = arith.constant dense<0.000000e+00> : vector<8xf32>
    %959 = vector.multi_reduction <add>, %958, %cst_236 [1] : vector<8x128xf32> to vector<8xf32>
    %960 = vector.shape_cast %959 : vector<8xf32> to vector<8x1xf32>
    %961 = arith.cmpf oge, %960, %848 : vector<8x1xf32>
    %962 = vector.broadcast %949 : vector<8x1xi32> to vector<8x128xi32>
    %963 = arith.cmpi slt, %850, %962 : vector<8x128xi32>
    %964 = arith.extui %963 : vector<8x128xi1> to vector<8x128xi32>
    %965 = arith.sitofp %964 : vector<8x128xi32> to vector<8x128xf32>
    %cst_237 = arith.constant dense<0.000000e+00> : vector<8xf32>
    %966 = vector.multi_reduction <add>, %965, %cst_237 [1] : vector<8x128xf32> to vector<8xf32>
    %967 = vector.shape_cast %966 : vector<8xf32> to vector<8x1xf32>
    %968 = arith.cmpf oge, %967, %848 : vector<8x1xf32>
    %969 = vector.broadcast %954 : vector<8x1xi32> to vector<8x128xi32>
    %970 = arith.cmpi slt, %850, %969 : vector<8x128xi32>
    %971 = arith.extui %970 : vector<8x128xi1> to vector<8x128xi32>
    %972 = arith.sitofp %971 : vector<8x128xi32> to vector<8x128xf32>
    %cst_238 = arith.constant dense<0.000000e+00> : vector<8xf32>
    %973 = vector.multi_reduction <add>, %972, %cst_238 [1] : vector<8x128xf32> to vector<8xf32>
    %974 = vector.shape_cast %973 : vector<8xf32> to vector<8x1xf32>
    %975 = arith.cmpf oge, %974, %848 : vector<8x1xf32>
    %976 = arith.select %975, %954, %933 : vector<8x1xi1>, vector<8x1xi32>
    %977 = arith.select %968, %949, %976 : vector<8x1xi1>, vector<8x1xi32>
    %978 = arith.select %961, %946, %977 : vector<8x1xi1>, vector<8x1xi32>
    %c1_i32_239 = arith.constant 1 : i32
    %979 = vector.broadcast %c1_i32_239 : i32 to vector<8x1xi32>
    %980 = arith.addi %946, %979 : vector<8x1xi32>
    %c1_i32_240 = arith.constant 1 : i32
    %981 = vector.broadcast %c1_i32_240 : i32 to vector<8x1xi32>
    %982 = arith.addi %949, %981 : vector<8x1xi32>
    %c1_i32_241 = arith.constant 1 : i32
    %983 = vector.broadcast %c1_i32_241 : i32 to vector<8x1xi32>
    %984 = arith.addi %954, %983 : vector<8x1xi32>
    %985 = arith.select %975, %982, %984 : vector<8x1xi1>, vector<8x1xi32>
    %986 = arith.select %968, %980, %985 : vector<8x1xi1>, vector<8x1xi32>
    %987 = arith.select %961, %942, %986 : vector<8x1xi1>, vector<8x1xi32>
    %c3_i32_242 = arith.constant 3 : i32
    %988 = arith.subi %978, %987 : vector<8x1xi32>
    %c2_i32_243 = arith.constant 2 : i32
    %989 = vector.broadcast %c2_i32_243 : i32 to vector<8x1xi32>
    %990 = arith.shrsi %988, %989 : vector<8x1xi32>
    %991 = arith.addi %987, %990 : vector<8x1xi32>
    %c1_i32_244 = arith.constant 1 : i32
    %992 = vector.broadcast %c1_i32_244 : i32 to vector<8x1xi32>
    %993 = arith.shrsi %988, %992 : vector<8x1xi32>
    %994 = arith.addi %987, %993 : vector<8x1xi32>
    %c3_i32_245 = arith.constant 3 : i32
    %995 = vector.broadcast %c3_i32_245 : i32 to vector<8x1xi32>
    %996 = arith.addi %988, %995 : vector<8x1xi32>
    %c2_i32_246 = arith.constant 2 : i32
    %997 = vector.broadcast %c2_i32_246 : i32 to vector<8x1xi32>
    %998 = arith.shrsi %996, %997 : vector<8x1xi32>
    %999 = arith.subi %978, %998 : vector<8x1xi32>
    %1000 = vector.broadcast %991 : vector<8x1xi32> to vector<8x128xi32>
    %1001 = arith.cmpi slt, %850, %1000 : vector<8x128xi32>
    %1002 = arith.extui %1001 : vector<8x128xi1> to vector<8x128xi32>
    %1003 = arith.sitofp %1002 : vector<8x128xi32> to vector<8x128xf32>
    %cst_247 = arith.constant dense<0.000000e+00> : vector<8xf32>
    %1004 = vector.multi_reduction <add>, %1003, %cst_247 [1] : vector<8x128xf32> to vector<8xf32>
    %1005 = vector.shape_cast %1004 : vector<8xf32> to vector<8x1xf32>
    %1006 = arith.cmpf oge, %1005, %848 : vector<8x1xf32>
    %1007 = vector.broadcast %994 : vector<8x1xi32> to vector<8x128xi32>
    %1008 = arith.cmpi slt, %850, %1007 : vector<8x128xi32>
    %1009 = arith.extui %1008 : vector<8x128xi1> to vector<8x128xi32>
    %1010 = arith.sitofp %1009 : vector<8x128xi32> to vector<8x128xf32>
    %cst_248 = arith.constant dense<0.000000e+00> : vector<8xf32>
    %1011 = vector.multi_reduction <add>, %1010, %cst_248 [1] : vector<8x128xf32> to vector<8xf32>
    %1012 = vector.shape_cast %1011 : vector<8xf32> to vector<8x1xf32>
    %1013 = arith.cmpf oge, %1012, %848 : vector<8x1xf32>
    %1014 = vector.broadcast %999 : vector<8x1xi32> to vector<8x128xi32>
    %1015 = arith.cmpi slt, %850, %1014 : vector<8x128xi32>
    %1016 = arith.extui %1015 : vector<8x128xi1> to vector<8x128xi32>
    %1017 = arith.sitofp %1016 : vector<8x128xi32> to vector<8x128xf32>
    %cst_249 = arith.constant dense<0.000000e+00> : vector<8xf32>
    %1018 = vector.multi_reduction <add>, %1017, %cst_249 [1] : vector<8x128xf32> to vector<8xf32>
    %1019 = vector.shape_cast %1018 : vector<8xf32> to vector<8x1xf32>
    %1020 = arith.cmpf oge, %1019, %848 : vector<8x1xf32>
    %1021 = arith.select %1020, %999, %978 : vector<8x1xi1>, vector<8x1xi32>
    %1022 = arith.select %1013, %994, %1021 : vector<8x1xi1>, vector<8x1xi32>
    %1023 = arith.select %1006, %991, %1022 : vector<8x1xi1>, vector<8x1xi32>
    %c1_i32_250 = arith.constant 1 : i32
    %1024 = vector.broadcast %c1_i32_250 : i32 to vector<8x1xi32>
    %1025 = arith.addi %991, %1024 : vector<8x1xi32>
    %c1_i32_251 = arith.constant 1 : i32
    %1026 = vector.broadcast %c1_i32_251 : i32 to vector<8x1xi32>
    %1027 = arith.addi %994, %1026 : vector<8x1xi32>
    %c1_i32_252 = arith.constant 1 : i32
    %1028 = vector.broadcast %c1_i32_252 : i32 to vector<8x1xi32>
    %1029 = arith.addi %999, %1028 : vector<8x1xi32>
    %1030 = arith.select %1020, %1027, %1029 : vector<8x1xi1>, vector<8x1xi32>
    %1031 = arith.select %1013, %1025, %1030 : vector<8x1xi1>, vector<8x1xi32>
    %1032 = arith.select %1006, %987, %1031 : vector<8x1xi1>, vector<8x1xi32>
    %c4_i32_253 = arith.constant 4 : i32
    %1033 = arith.subi %1023, %1032 : vector<8x1xi32>
    %c2_i32_254 = arith.constant 2 : i32
    %1034 = vector.broadcast %c2_i32_254 : i32 to vector<8x1xi32>
    %1035 = arith.shrsi %1033, %1034 : vector<8x1xi32>
    %1036 = arith.addi %1032, %1035 : vector<8x1xi32>
    %c1_i32_255 = arith.constant 1 : i32
    %1037 = vector.broadcast %c1_i32_255 : i32 to vector<8x1xi32>
    %1038 = arith.shrsi %1033, %1037 : vector<8x1xi32>
    %1039 = arith.addi %1032, %1038 : vector<8x1xi32>
    %c3_i32_256 = arith.constant 3 : i32
    %1040 = vector.broadcast %c3_i32_256 : i32 to vector<8x1xi32>
    %1041 = arith.addi %1033, %1040 : vector<8x1xi32>
    %c2_i32_257 = arith.constant 2 : i32
    %1042 = vector.broadcast %c2_i32_257 : i32 to vector<8x1xi32>
    %1043 = arith.shrsi %1041, %1042 : vector<8x1xi32>
    %1044 = arith.subi %1023, %1043 : vector<8x1xi32>
    %1045 = vector.broadcast %1036 : vector<8x1xi32> to vector<8x128xi32>
    %1046 = arith.cmpi slt, %850, %1045 : vector<8x128xi32>
    %1047 = arith.extui %1046 : vector<8x128xi1> to vector<8x128xi32>
    %1048 = arith.sitofp %1047 : vector<8x128xi32> to vector<8x128xf32>
    %cst_258 = arith.constant dense<0.000000e+00> : vector<8xf32>
    %1049 = vector.multi_reduction <add>, %1048, %cst_258 [1] : vector<8x128xf32> to vector<8xf32>
    %1050 = vector.shape_cast %1049 : vector<8xf32> to vector<8x1xf32>
    %1051 = arith.cmpf oge, %1050, %848 : vector<8x1xf32>
    %1052 = vector.broadcast %1039 : vector<8x1xi32> to vector<8x128xi32>
    %1053 = arith.cmpi slt, %850, %1052 : vector<8x128xi32>
    %1054 = arith.extui %1053 : vector<8x128xi1> to vector<8x128xi32>
    %1055 = arith.sitofp %1054 : vector<8x128xi32> to vector<8x128xf32>
    %cst_259 = arith.constant dense<0.000000e+00> : vector<8xf32>
    %1056 = vector.multi_reduction <add>, %1055, %cst_259 [1] : vector<8x128xf32> to vector<8xf32>
    %1057 = vector.shape_cast %1056 : vector<8xf32> to vector<8x1xf32>
    %1058 = arith.cmpf oge, %1057, %848 : vector<8x1xf32>
    %1059 = vector.broadcast %1044 : vector<8x1xi32> to vector<8x128xi32>
    %1060 = arith.cmpi slt, %850, %1059 : vector<8x128xi32>
    %1061 = arith.extui %1060 : vector<8x128xi1> to vector<8x128xi32>
    %1062 = arith.sitofp %1061 : vector<8x128xi32> to vector<8x128xf32>
    %cst_260 = arith.constant dense<0.000000e+00> : vector<8xf32>
    %1063 = vector.multi_reduction <add>, %1062, %cst_260 [1] : vector<8x128xf32> to vector<8xf32>
    %1064 = vector.shape_cast %1063 : vector<8xf32> to vector<8x1xf32>
    %1065 = arith.cmpf oge, %1064, %848 : vector<8x1xf32>
    %1066 = arith.select %1065, %1044, %1023 : vector<8x1xi1>, vector<8x1xi32>
    %1067 = arith.select %1058, %1039, %1066 : vector<8x1xi1>, vector<8x1xi32>
    %1068 = arith.select %1051, %1036, %1067 : vector<8x1xi1>, vector<8x1xi32>
    %c1_i32_261 = arith.constant 1 : i32
    %1069 = vector.broadcast %c1_i32_261 : i32 to vector<8x1xi32>
    %1070 = arith.addi %1036, %1069 : vector<8x1xi32>
    %c1_i32_262 = arith.constant 1 : i32
    %1071 = vector.broadcast %c1_i32_262 : i32 to vector<8x1xi32>
    %1072 = arith.addi %1039, %1071 : vector<8x1xi32>
    %c1_i32_263 = arith.constant 1 : i32
    %1073 = vector.broadcast %c1_i32_263 : i32 to vector<8x1xi32>
    %1074 = arith.addi %1044, %1073 : vector<8x1xi32>
    %1075 = arith.select %1065, %1072, %1074 : vector<8x1xi1>, vector<8x1xi32>
    %1076 = arith.select %1058, %1070, %1075 : vector<8x1xi1>, vector<8x1xi32>
    %1077 = arith.select %1051, %1032, %1076 : vector<8x1xi1>, vector<8x1xi32>
    %1078 = arith.ori %6, %841 : vector<8x128xi1>
    %1079 = vector.broadcast %1068 : vector<8x1xi32> to vector<8x128xi32>
    %1080 = arith.cmpi slt, %4, %1079 : vector<8x128xi32>
    %1081 = arith.andi %843, %1080 : vector<8x128xi1>
    %1082 = arith.ori %1078, %1081 : vector<8x128xi1>
    %cst_264 = arith.constant 0.000000e+00 : f32
    %1083 = vector.broadcast %cst_264 : f32 to vector<8x128xf32>
    %1084 = arith.select %1082, %30, %1083 : vector<8x128xi1>, vector<8x128xf32>
    %1085 = vector.shape_cast %1084 : vector<8x128xf32> to vector<1x8x128xf32>
    %cst_265 = arith.constant dense<0.000000e+00> : vector<1xf32>
    %1086 = vector.multi_reduction <add>, %1085, %cst_265 [1, 2] : vector<1x8x128xf32> to vector<1xf32>
    %1087 = vector.shape_cast %1086 : vector<1xf32> to vector<1x1x1xf32>
    %1088 = vector.extract %1087[0, 0, 0] : f32 from vector<1x1x1xf32>
    %1089 = arith.subf %1, %2 : vector<4x8x128xf32>
    %1090 = math.absf %1089 : vector<4x8x128xf32>
    %cst_266 = arith.constant 1.000000e+00 : f32
    %1091 = vector.broadcast %cst_266 : f32 to vector<4x8x128xf32>
    %1092 = arith.cmpf olt, %1090, %1091 : vector<4x8x128xf32>
    %cst_267 = arith.constant -2.000000e+00 : f32
    %1093 = vector.broadcast %cst_267 : f32 to vector<4x8x128xf32>
    %1094 = arith.mulf %1093, %1090 : vector<4x8x128xf32>
    %1095 = math.exp %1094 : vector<4x8x128xf32>
    %cst_268 = arith.constant 1.000000e+00 : f32
    %1096 = vector.broadcast %cst_268 : f32 to vector<4x8x128xf32>
    %1097 = arith.subf %1095, %1096 : vector<4x8x128xf32>
    %cst_269 = arith.constant 5.000000e-01 : f32
    %1098 = vector.broadcast %cst_269 : f32 to vector<4x8x128xf32>
    %1099 = arith.mulf %1098, %1097 : vector<4x8x128xf32>
    %1100 = arith.addf %1090, %1099 : vector<4x8x128xf32>
    %cst_270 = arith.constant 1.15651762 : f32
    %1101 = vector.broadcast %cst_270 : f32 to vector<4x8x128xf32>
    %1102 = arith.mulf %1101, %1100 : vector<4x8x128xf32>
    %cst_271 = arith.constant 1.000000e+00 : f32
    %1103 = vector.broadcast %cst_271 : f32 to vector<4x8x128xf32>
    %1104 = arith.mulf %1103, %1090 : vector<4x8x128xf32>
    %cst_272 = arith.constant -0.343482345 : f32
    %1105 = vector.broadcast %cst_272 : f32 to vector<4x8x128xf32>
    %1106 = arith.addf %1104, %1105 : vector<4x8x128xf32>
    %1107 = arith.select %1092, %1102, %1106 : vector<4x8x128xi1>, vector<4x8x128xf32>
    %1108 = vector.shape_cast %9 : vector<8x128xf32> to vector<1x8x128xf32>
    %1109 = vector.broadcast %1108 : vector<1x8x128xf32> to vector<4x8x128xf32>
    %1110 = arith.mulf %1107, %1109 : vector<4x8x128xf32>
    %1111 = vector.shape_cast %1110 : vector<4x8x128xf32> to vector<1x4x8x128xf32>
    %cst_273 = arith.constant dense<0.000000e+00> : vector<1xf32>
    %1112 = vector.multi_reduction <add>, %1111, %cst_273 [1, 2, 3] : vector<1x4x8x128xf32> to vector<1xf32>
    %1113 = vector.shape_cast %1112 : vector<1xf32> to vector<1x1x1x1xf32>
    %1114 = vector.extract %1113[0, 0, 0, 0] : f32 from vector<1x1x1x1xf32>
    %1115 = vector.shape_cast %9 : vector<8x128xf32> to vector<1x8x128xf32>
    %cst_274 = arith.constant dense<0.000000e+00> : vector<1xf32>
    %1116 = vector.multi_reduction <add>, %1115, %cst_274 [1, 2] : vector<1x8x128xf32> to vector<1xf32>
    %1117 = vector.shape_cast %1116 : vector<1xf32> to vector<1x1x1xf32>
    %1118 = vector.extract %1117[0, 0, 0] : f32 from vector<1x1x1xf32>
    %1119 = tpu.iota {dimensions = array<i32: 1>} : vector<1x8x128xi32>
    %c0_i32_275 = arith.constant 0 : i32
    %1120 = vector.broadcast %c0_i32_275 : i32 to vector<1x8x128xi32>
    %1121 = arith.cmpi eq, %1119, %1120 : vector<1x8x128xi32>
    %cst_276 = arith.constant 0.000000e+00 : f32
    %1122 = vector.broadcast %1088 : f32 to vector<1x8x128xf32>
    %1123 = vector.broadcast %cst_276 : f32 to vector<1x8x128xf32>
    %1124 = arith.select %1121, %1122, %1123 : vector<1x8x128xi1>, vector<1x8x128xf32>
    %c1_i32_277 = arith.constant 1 : i32
    %1125 = vector.broadcast %c1_i32_277 : i32 to vector<1x8x128xi32>
    %1126 = arith.cmpi eq, %1119, %1125 : vector<1x8x128xi32>
    %cst_278 = arith.constant 0.000000e+00 : f32
    %1127 = vector.broadcast %1114 : f32 to vector<1x8x128xf32>
    %1128 = vector.broadcast %cst_278 : f32 to vector<1x8x128xf32>
    %1129 = arith.select %1126, %1127, %1128 : vector<1x8x128xi1>, vector<1x8x128xf32>
    %1130 = arith.addf %1124, %1129 : vector<1x8x128xf32>
    %c2_i32_279 = arith.constant 2 : i32
    %1131 = vector.broadcast %c2_i32_279 : i32 to vector<1x8x128xi32>
    %1132 = arith.cmpi eq, %1119, %1131 : vector<1x8x128xi32>
    %cst_280 = arith.constant 0.000000e+00 : f32
    %1133 = vector.broadcast %1118 : f32 to vector<1x8x128xf32>
    %1134 = vector.broadcast %cst_280 : f32 to vector<1x8x128xf32>
    %1135 = arith.select %1132, %1133, %1134 : vector<1x8x128xi1>, vector<1x8x128xf32>
    %1136 = arith.addf %1130, %1135 : vector<1x8x128xf32>
    %c0_281 = arith.constant 0 : index
    %c0_282 = arith.constant 0 : index
    %c0_283 = arith.constant 0 : index
    %1137 = vector.load %arg5[%c0_281, %c0_282, %c0_283] : memref<1x8x128xf32, #tpu.memory_space<vmem>>, vector<1x8x128xf32>
    tpu.vector_store %arg5[%c0_281, %c0_282, %c0_283], %1136 {strides = array<i32>} : memref<1x8x128xf32, #tpu.memory_space<vmem>>, vector<1x8x128xf32>,
    return
  }
  func.func @transform_0(%arg0: i32) -> (i32, i32, i32) {
    %c0_i32 = arith.constant 0 : i32
    %c0_i32_0 = arith.constant 0 : i32
    %c0_i32_1 = arith.constant 0 : i32
    return %c0_i32, %arg0, %c0_i32_0 : i32, i32, i32
  }
  func.func @transform_1(%arg0: i32) -> (i32, i32, i32) {
    %c0_i32 = arith.constant 0 : i32
    %c0_i32_0 = arith.constant 0 : i32
    %c0_i32_1 = arith.constant 0 : i32
    return %c0_i32, %arg0, %c0_i32_0 : i32, i32, i32
  }
  func.func @transform_2(%arg0: i32) -> (i32, i32, i32) {
    %c0_i32 = arith.constant 0 : i32
    %c0_i32_0 = arith.constant 0 : i32
    %c0_i32_1 = arith.constant 0 : i32
    return %c0_i32, %arg0, %c0_i32_0 : i32, i32, i32
  }
  func.func @transform_3(%arg0: i32) -> (i32, i32) {
    %c0_i32 = arith.constant 0 : i32
    %c0_i32_0 = arith.constant 0 : i32
    return %arg0, %c0_i32 : i32, i32
  }
  func.func @transform_4(%arg0: i32) -> (i32, i32, i32) {
    %c0_i32 = arith.constant 0 : i32
    %c0_i32_0 = arith.constant 0 : i32
    %c0_i32_1 = arith.constant 0 : i32
    return %arg0, %c0_i32, %c0_i32_0 : i32, i32, i32
  }
}

</mosaic_0001>

<llo_original>
// kernel: _multibox_loss_forward.1
$region0: #{_multibox_loss_forward.1}
  #allocation0 [shape = 'u32[]', space=smem, size = 0x4, offset = 0x4, fixed_abs, tag = 'smem constant byte address 0x4 - core index']
  #allocation1 [shape = 'u32[144,128]{1,0:T(1,128)}', space=vmem, size = 0x12000, scoped, tag = 'internal scratch']
  %s0 = inlined_call_operand.vmem [shape: f32[8,8,128], index: 0, kind: input, shape index: {}]
  %s1 = inlined_call_operand.vmem [shape: f32[4,8,128], index: 1, kind: input, shape index: {}]
  %s2 = inlined_call_operand.vmem [shape: f32[4,8,128], index: 2, kind: input, shape index: {}]
  %s3 = inlined_call_operand.vmem [shape: s32[8,128], index: 3, kind: input, shape index: {}]
  %s4 = inlined_call_operand.vmem [shape: f32[1,8,128], index: 4, kind: output, shape index: {}]
  %s5 = sld [smem:[#allocation0]]
  $region26: #{_multibox_loss_forward.1} parent=0
    _
  %s7 = ssub.s32 1, %s5
  %s8 = scalar_select 0, %s7, %s5
  // Predicated region
  $region2: #{_multibox_loss_forward.1} parent=0 // pred_check
    _
  $region3: #{_multibox_loss_forward.1} parent=0 // pred_check_branch
    %10 = sbr.rel (0) target = $region5
  $region4: #{_multibox_loss_forward.1} parent=0 // pred_region
    _
  $region5: #{_multibox_loss_forward.1} parent=0 // pred_fallthru
    _
  // Predicated region
  $region6: #{_multibox_loss_forward.1} parent=0 // pred_check
    _
  $region7: #{_multibox_loss_forward.1} parent=0 // pred_check_branch
    %12 = sbr.rel (0) target = $region9
  $region8: #{_multibox_loss_forward.1} parent=0 // pred_region
    _
  $region9: #{_multibox_loss_forward.1} parent=0 // pred_fallthru
    _
  // Predicated region
  $region10: #{_multibox_loss_forward.1} parent=0 // pred_check
    _
  $region11: #{_multibox_loss_forward.1} parent=0 // pred_check_branch
    %14 = sbr.rel (0) target = $region13
  $region12: #{_multibox_loss_forward.1} parent=0 // pred_region
    _
  $region13: #{_multibox_loss_forward.1} parent=0 // pred_fallthru
    _
  // Predicated region
  $region14: #{_multibox_loss_forward.1} parent=0 // pred_check
    _
  $region15: #{_multibox_loss_forward.1} parent=0 // pred_check_branch
    %16 = sbr.rel (0) target = $region17
  $region16: #{_multibox_loss_forward.1} parent=0 // pred_region
    _
  $region17: #{_multibox_loss_forward.1} parent=0 // pred_fallthru
    _
  %v17 = vld [vmem:[%s0] sm:$0xff]
  %v18 = vld [vmem:[%s0 + $0x8] sm:$0xff]
  %v19 = vld [vmem:[%s0 + $0x10] sm:$0xff]
  %v20 = vld [vmem:[%s0 + $0x18] sm:$0xff]
  %v21 = vld [vmem:[%s0 + $0x20] sm:$0xff]
  %v22 = vld [vmem:[%s0 + $0x28] sm:$0xff]
  %v23 = vld [vmem:[%s0 + $0x30] sm:$0xff]
  %v24 = vld [vmem:[%s0 + $0x38] sm:$0xff]
  %v25 = vld [vmem:[%s1] sm:$0xff]
  %v26 = vld [vmem:[%s1 + $0x8] sm:$0xff]
  %v27 = vld [vmem:[%s1 + $0x10] sm:$0xff]
  %v28 = vld [vmem:[%s1 + $0x18] sm:$0xff]
  %v29 = vld [vmem:[%s2] sm:$0xff]
  %v30 = vld [vmem:[%s2 + $0x8] sm:$0xff]
  %v31 = vld [vmem:[%s2 + $0x10] sm:$0xff]
  %v32 = vld [vmem:[%s2 + $0x18] sm:$0xff]
  %v33 = vld [vmem:[%s3] sm:$0xff]
  %v34 = vlaneseq
  %v35 = vand.u32 %v34, 127
  %vm36 = vcmp.gt.s32.totalorder %v33, 0
  %vm37 = vmxor %vm36, 1
  %v38 = vsel %vm36, 1, 0
  %v39 = vcvt.s32.f32 %v38
  %v40 = vmax.f32 %v17, %v21
  %v41 = vmax.f32 %v18, %v22
  %v42 = vmax.f32 %v19, %v23
  %v43 = vmax.f32 %v20, %v24
  %v44 = vmax.f32 %v40, %v41
  %v45 = vmax.f32 %v42, %v43
  %v46 = vmax.f32 %v44, %v45
  %v47 = vsub.f32 %v17, %v46
  %v48 = vsub.f32 %v18, %v46
  %v49 = vsub.f32 %v19, %v46
  %v50 = vsub.f32 %v20, %v46
  %v51 = vsub.f32 %v21, %v46
  %v52 = vsub.f32 %v22, %v46
  %v53 = vsub.f32 %v23, %v46
  %v54 = vsub.f32 %v24, %v46
  %v55 = vmul.f32 %v47, 1.442695
  %v56 = vpow.pop %v55
  %v57 = vmul.f32 %v48, 1.442695
  %v58 = vpow.pop %v57
  %v59 = vmul.f32 %v49, 1.442695
  %v60 = vpow.pop %v59
  %v61 = vmul.f32 %v50, 1.442695
  %v62 = vpow.pop %v61
  %v63 = vmul.f32 %v51, 1.442695
  %v64 = vpow.pop %v63
  %v65 = vmul.f32 %v52, 1.442695
  %v66 = vpow.pop %v65
  %v67 = vmul.f32 %v53, 1.442695
  %v68 = vpow.pop %v67
  %v69 = vmul.f32 %v54, 1.442695
  %v70 = vpow.pop %v69
  %v71 = vadd.f32 %v56, %v58
  %v72 = vadd.f32 %v71, %v60
  %v73 = vadd.f32 %v72, %v62
  %v74 = vadd.f32 %v73, %v64
  %v75 = vadd.f32 %v74, %v66
  %v76 = vadd.f32 %v75, %v68
  %v77 = vadd.f32 %v76, %v70
  %v78 = vlog2.pop %v77
  %v79 = vmul.f32 %v78, 0.6931472
  %v80 = vadd.f32 %v46, %v79
  %v81 = vsub.f32 %v80, %v17
  %v82 = vmax.f32 %v81, 0.0
  %vm83 = vcmp.eq.s32.totalorder %v33, 0
  %vm84 = vcmp.eq.s32.totalorder %v33, 1
  %vm85 = vcmp.eq.s32.totalorder %v33, 2
  %vm86 = vcmp.eq.s32.totalorder %v33, 3
  %vm87 = vcmp.eq.s32.totalorder %v33, 4
  %vm88 = vcmp.eq.s32.totalorder %v33, 5
  %vm89 = vcmp.eq.s32.totalorder %v33, 6
  %vm90 = vcmp.eq.s32.totalorder %v33, 7
  %v91 = vsel %vm83, %v17, 0.0
  %v92 = vsel %vm84, %v18, 0.0
  %v93 = vsel %vm85, %v19, 0.0
  %v94 = vsel %vm86, %v20, 0.0
  %v95 = vsel %vm87, %v21, 0.0
  %v96 = vsel %vm88, %v22, 0.0
  %v97 = vsel %vm89, %v23, 0.0
  %v98 = vsel %vm90, %v24, 0.0
  %v99 = vadd.f32 %v91, %v92
  %v100 = vadd.f32 %v99, %v93
  %v101 = vadd.f32 %v100, %v94
  %v102 = vadd.f32 %v101, %v95
  %v103 = vadd.f32 %v102, %v96
  %v104 = vadd.f32 %v103, %v97
  %v105 = vadd.f32 %v104, %v98
  %v106 = vsub.f32 %v80, %v105
  %107 = vadd.xlane.f32.xlu0 %v39
  %v108 = vpop.xlane.xlu0 %107
  %v109 = vmul.f32 %v108, 3.0
  %v110 = vceil.f32 %v109
  %v112 = vsel %vm37, %v82, 4294967295
  %vm113 = vcmp.ge.s32.totalorder %v112, 534773760
  %v114 = vsel %vm113, 1, 0
  %v115 = vcvt.s32.f32 %v114
  %116 = vadd.xlane.f32.xlu0 %v115
  %v117 = vpop.xlane.xlu0 %116
  %vm118 = vcmp.ge.f32.partialorder %v117, %v110
  %vm119 = vcmp.ge.s32.totalorder %v112, 1069547520
  %v120 = vsel %vm119, 1, 0
  %v121 = vcvt.s32.f32 %v120
  %122 = vadd.xlane.f32.xlu0 %v121
  %v123 = vpop.xlane.xlu0 %122
  %vm124 = vcmp.ge.f32.partialorder %v123, %v110
  %vm125 = vcmp.ge.s32.totalorder %v112, 1604321280
  %v126 = vsel %vm125, 1, 0
  %v127 = vcvt.s32.f32 %v126
  %128 = vadd.xlane.f32.xlu0 %v127
  %v129 = vpop.xlane.xlu0 %128
  %vm130 = vcmp.ge.f32.partialorder %v129, %v110
  %v131 = vsel %vm118, 534773760, 0
  %v132 = vsel %vm124, 1069547520, %v131
  %v133 = vsel %vm130, 1604321280, %v132
  %v134 = vsel %vm118, 1069547519, 534773759
  %v135 = vsel %vm124, 1604321279, %v134
  %v136 = vsel %vm130, 2139095040, %v135
  %v137 = vsub.s32 %v136, %v133
  %v138 = vadd.s32 %v137, 3
  %v139 = vshra.s32 %v138, 2
  %v140 = vadd.s32 %v133, %v139
  %v141 = vadd.s32 %v137, 1
  %v142 = vshra.s32 %v141, 1
  %v143 = vadd.s32 %v133, %v142
  %v144 = vshra.s32 %v137, 2
  %v145 = vsub.s32 %v136, %v144
  %vm146 = vcmp.ge.s32.totalorder %v112, %v140
  %v147 = vsel %vm146, 1, 0
  %v148 = vcvt.s32.f32 %v147
  %149 = vadd.xlane.f32.xlu0 %v148
  %v150 = vpop.xlane.xlu0 %149
  %vm151 = vcmp.ge.f32.partialorder %v150, %v110
  %vm152 = vcmp.ge.s32.totalorder %v112, %v143
  %v153 = vsel %vm152, 1, 0
  %v154 = vcvt.s32.f32 %v153
  %155 = vadd.xlane.f32.xlu0 %v154
  %v156 = vpop.xlane.xlu0 %155
  %vm157 = vcmp.ge.f32.partialorder %v156, %v110
  %vm158 = vcmp.ge.s32.totalorder %v112, %v145
  %v159 = vsel %vm158, 1, 0
  %v160 = vcvt.s32.f32 %v159
  %161 = vadd.xlane.f32.xlu0 %v160
  %v162 = vpop.xlane.xlu0 %161
  %vm163 = vcmp.ge.f32.partialorder %v162, %v110
  %v164 = vsel %vm151, %v140, %v133
  %v165 = vsel %vm157, %v143, %v164
  %v166 = vsel %vm163, %v145, %v165
  %v167 = vsub.s32 %v145, 1
  %v168 = vsub.s32 %v143, 1
  %v169 = vsub.s32 %v140, 1
  %v170 = vsel %vm151, %v168, %v169
  %v171 = vsel %vm157, %v167, %v170
  %v172 = vsel %vm163, %v136, %v171
  %v173 = vsub.s32 %v172, %v166
  %v174 = vadd.s32 %v173, 3
  %v175 = vshra.s32 %v174, 2
  %v176 = vadd.s32 %v166, %v175
  %v177 = vadd.s32 %v173, 1
  %v178 = vshra.s32 %v177, 1
  %v179 = vadd.s32 %v166, %v178
  %v180 = vshra.s32 %v173, 2
  %v181 = vsub.s32 %v172, %v180
  %vm182 = vcmp.ge.s32.totalorder %v112, %v176
  %v183 = vsel %vm182, 1, 0
  %v184 = vcvt.s32.f32 %v183
  %185 = vadd.xlane.f32.xlu0 %v184
  %v186 = vpop.xlane.xlu0 %185
  %vm187 = vcmp.ge.f32.partialorder %v186, %v110
  %vm188 = vcmp.ge.s32.totalorder %v112, %v179
  %v189 = vsel %vm188, 1, 0
  %v190 = vcvt.s32.f32 %v189
  %191 = vadd.xlane.f32.xlu0 %v190
  %v192 = vpop.xlane.xlu0 %191
  %vm193 = vcmp.ge.f32.partialorder %v192, %v110
  %vm194 = vcmp.ge.s32.totalorder %v112, %v181
  %v195 = vsel %vm194, 1, 0
  %v196 = vcvt.s32.f32 %v195
  %197 = vadd.xlane.f32.xlu0 %v196
  %v198 = vpop.xlane.xlu0 %197
  %vm199 = vcmp.ge.f32.partialorder %v198, %v110
  %v200 = vsel %vm187, %v176, %v166
  %v201 = vsel %vm193, %v179, %v200
  %v202 = vsel %vm199, %v181, %v201
  %v203 = vsub.s32 %v181, 1
  %v204 = vsub.s32 %v179, 1
  %v205 = vsub.s32 %v176, 1
  %v206 = vsel %vm187, %v204, %v205
  %v207 = vsel %vm193, %v203, %v206
  %v208 = vsel %vm199, %v172, %v207
  %v209 = vsub.s32 %v208, %v202
  %v210 = vadd.s32 %v209, 3
  %v211 = vshra.s32 %v210, 2
  %v212 = vadd.s32 %v202, %v211
  %v213 = vadd.s32 %v209, 1
  %v214 = vshra.s32 %v213, 1
  %v215 = vadd.s32 %v202, %v214
  %v216 = vshra.s32 %v209, 2
  %v217 = vsub.s32 %v208, %v216
  %vm218 = vcmp.ge.s32.totalorder %v112, %v212
  %v219 = vsel %vm218, 1, 0
  %v220 = vcvt.s32.f32 %v219
  %221 = vadd.xlane.f32.xlu0 %v220
  %v222 = vpop.xlane.xlu0 %221
  %vm223 = vcmp.ge.f32.partialorder %v222, %v110
  %vm224 = vcmp.ge.s32.totalorder %v112, %v215
  %v225 = vsel %vm224, 1, 0
  %v226 = vcvt.s32.f32 %v225
  %227 = vadd.xlane.f32.xlu0 %v226
  %v228 = vpop.xlane.xlu0 %227
  %vm229 = vcmp.ge.f32.partialorder %v228, %v110
  %vm230 = vcmp.ge.s32.totalorder %v112, %v217
  %v231 = vsel %vm230, 1, 0
  %v232 = vcvt.s32.f32 %v231
  %233 = vadd.xlane.f32.xlu0 %v232
  %v234 = vpop.xlane.xlu0 %233
  %vm235 = vcmp.ge.f32.partialorder %v234, %v110
  %v236 = vsel %vm223, %v212, %v202
  %v237 = vsel %vm229, %v215, %v236
  %v238 = vsel %vm235, %v217, %v237
  %v239 = vsub.s32 %v217, 1
  %v240 = vsub.s32 %v215, 1
  %v241 = vsub.s32 %v212, 1
  %v242 = vsel %vm223, %v240, %v241
  %v243 = vsel %vm229, %v239, %v242
  %v244 = vsel %vm235, %v208, %v243
  %v245 = vsub.s32 %v244, %v238
  %v246 = vadd.s32 %v245, 3
  %v247 = vshra.s32 %v246, 2
  %v248 = vadd.s32 %v238, %v247
  %v249 = vadd.s32 %v245, 1
  %v250 = vshra.s32 %v249, 1
  %v251 = vadd.s32 %v238, %v250
  %v252 = vshra.s32 %v245, 2
  %v253 = vsub.s32 %v244, %v252
  %vm254 = vcmp.ge.s32.totalorder %v112, %v248
  %v255 = vsel %vm254, 1, 0
  %v256 = vcvt.s32.f32 %v255
  %257 = vadd.xlane.f32.xlu0 %v256
  %v258 = vpop.xlane.xlu0 %257
  %vm259 = vcmp.ge.f32.partialorder %v258, %v110
  %vm260 = vcmp.ge.s32.totalorder %v112, %v251
  %v261 = vsel %vm260, 1, 0
  %v262 = vcvt.s32.f32 %v261
  %263 = vadd.xlane.f32.xlu0 %v262
  %v264 = vpop.xlane.xlu0 %263
  %vm265 = vcmp.ge.f32.partialorder %v264, %v110
  %vm266 = vcmp.ge.s32.totalorder %v112, %v253
  %v267 = vsel %vm266, 1, 0
  %v268 = vcvt.s32.f32 %v267
  %269 = vadd.xlane.f32.xlu0 %v268
  %v270 = vpop.xlane.xlu0 %269
  %vm271 = vcmp.ge.f32.partialorder %v270, %v110
  %v272 = vsel %vm259, %v248, %v238
  %v273 = vsel %vm265, %v251, %v272
  %v274 = vsel %vm271, %v253, %v273
  %v275 = vsub.s32 %v253, 1
  %v276 = vsub.s32 %v251, 1
  %v277 = vsub.s32 %v248, 1
  %v278 = vsel %vm259, %v276, %v277
  %v279 = vsel %vm265, %v275, %v278
  %v280 = vsel %vm271, %v244, %v279
  %v281 = vsub.s32 %v280, %v274
  %v282 = vadd.s32 %v281, 3
  %v283 = vshra.s32 %v282, 2
  %v284 = vadd.s32 %v274, %v283
  %v285 = vadd.s32 %v281, 1
  %v286 = vshra.s32 %v285, 1
  %v287 = vadd.s32 %v274, %v286
  %v288 = vshra.s32 %v281, 2
  %v289 = vsub.s32 %v280, %v288
  %vm290 = vcmp.ge.s32.totalorder %v112, %v284
  %v291 = vsel %vm290, 1, 0
  %v292 = vcvt.s32.f32 %v291
  %293 = vadd.xlane.f32.xlu0 %v292
  %v294 = vpop.xlane.xlu0 %293
  %vm295 = vcmp.ge.f32.partialorder %v294, %v110
  %vm296 = vcmp.ge.s32.totalorder %v112, %v287
  %v297 = vsel %vm296, 1, 0
  %v298 = vcvt.s32.f32 %v297
  %299 = vadd.xlane.f32.xlu0 %v298
  %v300 = vpop.xlane.xlu0 %299
  %vm301 = vcmp.ge.f32.partialorder %v300, %v110
  %vm302 = vcmp.ge.s32.totalorder %v112, %v289
  %v303 = vsel %vm302, 1, 0
  %v304 = vcvt.s32.f32 %v303
  %305 = vadd.xlane.f32.xlu0 %v304
  %v306 = vpop.xlane.xlu0 %305
  %vm307 = vcmp.ge.f32.partialorder %v306, %v110
  %v308 = vsel %vm295, %v284, %v274
  %v309 = vsel %vm301, %v287, %v308
  %v310 = vsel %vm307, %v289, %v309
  %v311 = vsub.s32 %v289, 1
  %v312 = vsub.s32 %v287, 1
  %v313 = vsub.s32 %v284, 1
  %v314 = vsel %vm295, %v312, %v313
  %v315 = vsel %vm301, %v311, %v314
  %v316 = vsel %vm307, %v280, %v315
  %v317 = vsub.s32 %v316, %v310
  %v318 = vadd.s32 %v317, 3
  %v319 = vshra.s32 %v318, 2
  %v320 = vadd.s32 %v310, %v319
  %v321 = vadd.s32 %v317, 1
  %v322 = vshra.s32 %v321, 1
  %v323 = vadd.s32 %v310, %v322
  %v324 = vshra.s32 %v317, 2
  %v325 = vsub.s32 %v316, %v324
  %vm326 = vcmp.ge.s32.totalorder %v112, %v320
  %v327 = vsel %vm326, 1, 0
  %v328 = vcvt.s32.f32 %v327
  %329 = vadd.xlane.f32.xlu0 %v328
  %v330 = vpop.xlane.xlu0 %329
  %vm331 = vcmp.ge.f32.partialorder %v330, %v110
  %vm332 = vcmp.ge.s32.totalorder %v112, %v323
  %v333 = vsel %vm332, 1, 0
  %v334 = vcvt.s32.f32 %v333
  %335 = vadd.xlane.f32.xlu0 %v334
  %v336 = vpop.xlane.xlu0 %335
  %vm337 = vcmp.ge.f32.partialorder %v336, %v110
  %vm338 = vcmp.ge.s32.totalorder %v112, %v325
  %v339 = vsel %vm338, 1, 0
  %v340 = vcvt.s32.f32 %v339
  %341 = vadd.xlane.f32.xlu0 %v340
  %v342 = vpop.xlane.xlu0 %341
  %vm343 = vcmp.ge.f32.partialorder %v342, %v110
  %v344 = vsel %vm331, %v320, %v310
  %v345 = vsel %vm337, %v323, %v344
  %v346 = vsel %vm343, %v325, %v345
  %v347 = vsub.s32 %v325, 1
  %v348 = vsub.s32 %v323, 1
  %v349 = vsub.s32 %v320, 1
  %v350 = vsel %vm331, %v348, %v349
  %v351 = vsel %vm337, %v347, %v350
  %v352 = vsel %vm343, %v316, %v351
  %v353 = vsub.s32 %v352, %v346
  %v354 = vadd.s32 %v353, 3
  %v355 = vshra.s32 %v354, 2
  %v356 = vadd.s32 %v346, %v355
  %v357 = vadd.s32 %v353, 1
  %v358 = vshra.s32 %v357, 1
  %v359 = vadd.s32 %v346, %v358
  %v360 = vshra.s32 %v353, 2
  %v361 = vsub.s32 %v352, %v360
  %vm362 = vcmp.ge.s32.totalorder %v112, %v356
  %v363 = vsel %vm362, 1, 0
  %v364 = vcvt.s32.f32 %v363
  %365 = vadd.xlane.f32.xlu0 %v364
  %v366 = vpop.xlane.xlu0 %365
  %vm367 = vcmp.ge.f32.partialorder %v366, %v110
  %vm368 = vcmp.ge.s32.totalorder %v112, %v359
  %v369 = vsel %vm368, 1, 0
  %v370 = vcvt.s32.f32 %v369
  %371 = vadd.xlane.f32.xlu0 %v370
  %v372 = vpop.xlane.xlu0 %371
  %vm373 = vcmp.ge.f32.partialorder %v372, %v110
  %vm374 = vcmp.ge.s32.totalorder %v112, %v361
  %v375 = vsel %vm374, 1, 0
  %v376 = vcvt.s32.f32 %v375
  %377 = vadd.xlane.f32.xlu0 %v376
  %v378 = vpop.xlane.xlu0 %377
  %vm379 = vcmp.ge.f32.partialorder %v378, %v110
  %v380 = vsel %vm367, %v356, %v346
  %v381 = vsel %vm373, %v359, %v380
  %v382 = vsel %vm379, %v361, %v381
  %v383 = vsub.s32 %v361, 1
  %v384 = vsub.s32 %v359, 1
  %v385 = vsub.s32 %v356, 1
  %v386 = vsel %vm367, %v384, %v385
  %v387 = vsel %vm373, %v383, %v386
  %v388 = vsel %vm379, %v352, %v387
  %v389 = vsub.s32 %v388, %v382
  %v390 = vadd.s32 %v389, 3
  %v391 = vshra.s32 %v390, 2
  %v392 = vadd.s32 %v382, %v391
  %v393 = vadd.s32 %v389, 1
  %v394 = vshra.s32 %v393, 1
  %v395 = vadd.s32 %v382, %v394
  %v396 = vshra.s32 %v389, 2
  %v397 = vsub.s32 %v388, %v396
  %vm398 = vcmp.ge.s32.totalorder %v112, %v392
  %v399 = vsel %vm398, 1, 0
  %v400 = vcvt.s32.f32 %v399
  %401 = vadd.xlane.f32.xlu0 %v400
  %v402 = vpop.xlane.xlu0 %401
  %vm403 = vcmp.ge.f32.partialorder %v402, %v110
  %vm404 = vcmp.ge.s32.totalorder %v112, %v395
  %v405 = vsel %vm404, 1, 0
  %v406 = vcvt.s32.f32 %v405
  %407 = vadd.xlane.f32.xlu0 %v406
  %v408 = vpop.xlane.xlu0 %407
  %vm409 = vcmp.ge.f32.partialorder %v408, %v110
  %vm410 = vcmp.ge.s32.totalorder %v112, %v397
  %v411 = vsel %vm410, 1, 0
  %v412 = vcvt.s32.f32 %v411
  %413 = vadd.xlane.f32.xlu0 %v412
  %v414 = vpop.xlane.xlu0 %413
  %vm415 = vcmp.ge.f32.partialorder %v414, %v110
  %v416 = vsel %vm403, %v392, %v382
  %v417 = vsel %vm409, %v395, %v416
  %v418 = vsel %vm415, %v397, %v417
  %v419 = vsub.s32 %v397, 1
  %v420 = vsub.s32 %v395, 1
  %v421 = vsub.s32 %v392, 1
  %v422 = vsel %vm403, %v420, %v421
  %v423 = vsel %vm409, %v419, %v422
  %v424 = vsel %vm415, %v388, %v423
  %v425 = vsub.s32 %v424, %v418
  %v426 = vadd.s32 %v425, 3
  %v427 = vshra.s32 %v426, 2
  %v428 = vadd.s32 %v418, %v427
  %v429 = vadd.s32 %v425, 1
  %v430 = vshra.s32 %v429, 1
  %v431 = vadd.s32 %v418, %v430
  %v432 = vshra.s32 %v425, 2
  %v433 = vsub.s32 %v424, %v432
  %vm434 = vcmp.ge.s32.totalorder %v112, %v428
  %v435 = vsel %vm434, 1, 0
  %v436 = vcvt.s32.f32 %v435
  %437 = vadd.xlane.f32.xlu0 %v436
  %v438 = vpop.xlane.xlu0 %437
  %vm439 = vcmp.ge.f32.partialorder %v438, %v110
  %vm440 = vcmp.ge.s32.totalorder %v112, %v431
  %v441 = vsel %vm440, 1, 0
  %v442 = vcvt.s32.f32 %v441
  %443 = vadd.xlane.f32.xlu0 %v442
  %v444 = vpop.xlane.xlu0 %443
  %vm445 = vcmp.ge.f32.partialorder %v444, %v110
  %vm446 = vcmp.ge.s32.totalorder %v112, %v433
  %v447 = vsel %vm446, 1, 0
  %v448 = vcvt.s32.f32 %v447
  %449 = vadd.xlane.f32.xlu0 %v448
  %v450 = vpop.xlane.xlu0 %449
  %vm451 = vcmp.ge.f32.partialorder %v450, %v110
  %v452 = vsel %vm439, %v428, %v418
  %v453 = vsel %vm445, %v431, %v452
  %v454 = vsel %vm451, %v433, %v453
  %v455 = vsub.s32 %v433, 1
  %v456 = vsub.s32 %v431, 1
  %v457 = vsub.s32 %v428, 1
  %v458 = vsel %vm439, %v456, %v457
  %v459 = vsel %vm445, %v455, %v458
  %v460 = vsel %vm451, %v424, %v459
  %v461 = vsub.s32 %v460, %v454
  %v462 = vadd.s32 %v461, 3
  %v463 = vshra.s32 %v462, 2
  %v464 = vadd.s32 %v454, %v463
  %v465 = vadd.s32 %v461, 1
  %v466 = vshra.s32 %v465, 1
  %v467 = vadd.s32 %v454, %v466
  %v468 = vshra.s32 %v461, 2
  %v469 = vsub.s32 %v460, %v468
  %vm470 = vcmp.ge.s32.totalorder %v112, %v464
  %v471 = vsel %vm470, 1, 0
  %v472 = vcvt.s32.f32 %v471
  %473 = vadd.xlane.f32.xlu0 %v472
  %v474 = vpop.xlane.xlu0 %473
  %vm475 = vcmp.ge.f32.partialorder %v474, %v110
  %vm476 = vcmp.ge.s32.totalorder %v112, %v467
  %v477 = vsel %vm476, 1, 0
  %v478 = vcvt.s32.f32 %v477
  %479 = vadd.xlane.f32.xlu0 %v478
  %v480 = vpop.xlane.xlu0 %479
  %vm481 = vcmp.ge.f32.partialorder %v480, %v110
  %vm482 = vcmp.ge.s32.totalorder %v112, %v469
  %v483 = vsel %vm482, 1, 0
  %v484 = vcvt.s32.f32 %v483
  %485 = vadd.xlane.f32.xlu0 %v484
  %v486 = vpop.xlane.xlu0 %485
  %vm487 = vcmp.ge.f32.partialorder %v486, %v110
  %v488 = vsel %vm475, %v464, %v454
  %v489 = vsel %vm481, %v467, %v488
  %v490 = vsel %vm487, %v469, %v489
  %v491 = vsub.s32 %v469, 1
  %v492 = vsub.s32 %v467, 1
  %v493 = vsub.s32 %v464, 1
  %v494 = vsel %vm475, %v492, %v493
  %v495 = vsel %vm481, %v491, %v494
  %v496 = vsel %vm487, %v460, %v495
  %v497 = vsub.s32 %v496, %v490
  %v498 = vadd.s32 %v497, 3
  %v499 = vshra.s32 %v498, 2
  %v500 = vadd.s32 %v490, %v499
  %v501 = vadd.s32 %v497, 1
  %v502 = vshra.s32 %v501, 1
  %v503 = vadd.s32 %v490, %v502
  %v504 = vshra.s32 %v497, 2
  %v505 = vsub.s32 %v496, %v504
  %vm506 = vcmp.ge.s32.totalorder %v112, %v500
  %v507 = vsel %vm506, 1, 0
  %v508 = vcvt.s32.f32 %v507
  %509 = vadd.xlane.f32.xlu0 %v508
  %v510 = vpop.xlane.xlu0 %509
  %vm511 = vcmp.ge.f32.partialorder %v510, %v110
  %vm512 = vcmp.ge.s32.totalorder %v112, %v503
  %v513 = vsel %vm512, 1, 0
  %v514 = vcvt.s32.f32 %v513
  %515 = vadd.xlane.f32.xlu0 %v514
  %v516 = vpop.xlane.xlu0 %515
  %vm517 = vcmp.ge.f32.partialorder %v516, %v110
  %vm518 = vcmp.ge.s32.totalorder %v112, %v505
  %v519 = vsel %vm518, 1, 0
  %v520 = vcvt.s32.f32 %v519
  %521 = vadd.xlane.f32.xlu0 %v520
  %v522 = vpop.xlane.xlu0 %521
  %vm523 = vcmp.ge.f32.partialorder %v522, %v110
  %v524 = vsel %vm511, %v500, %v490
  %v525 = vsel %vm517, %v503, %v524
  %v526 = vsel %vm523, %v505, %v525
  %v527 = vsub.s32 %v505, 1
  %v528 = vsub.s32 %v503, 1
  %v529 = vsub.s32 %v500, 1
  %v530 = vsel %vm511, %v528, %v529
  %v531 = vsel %vm517, %v527, %v530
  %v532 = vsel %vm523, %v496, %v531
  %v533 = vsub.s32 %v532, %v526
  %v534 = vadd.s32 %v533, 3
  %v535 = vshra.s32 %v534, 2
  %v536 = vadd.s32 %v526, %v535
  %v537 = vadd.s32 %v533, 1
  %v538 = vshra.s32 %v537, 1
  %v539 = vadd.s32 %v526, %v538
  %v540 = vshra.s32 %v533, 2
  %v541 = vsub.s32 %v532, %v540
  %vm542 = vcmp.ge.s32.totalorder %v112, %v536
  %v543 = vsel %vm542, 1, 0
  %v544 = vcvt.s32.f32 %v543
  %545 = vadd.xlane.f32.xlu0 %v544
  %v546 = vpop.xlane.xlu0 %545
  %vm547 = vcmp.ge.f32.partialorder %v546, %v110
  %vm548 = vcmp.ge.s32.totalorder %v112, %v539
  %v549 = vsel %vm548, 1, 0
  %v550 = vcvt.s32.f32 %v549
  %551 = vadd.xlane.f32.xlu0 %v550
  %v552 = vpop.xlane.xlu0 %551
  %vm553 = vcmp.ge.f32.partialorder %v552, %v110
  %vm554 = vcmp.ge.s32.totalorder %v112, %v541
  %v555 = vsel %vm554, 1, 0
  %v556 = vcvt.s32.f32 %v555
  %557 = vadd.xlane.f32.xlu0 %v556
  %v558 = vpop.xlane.xlu0 %557
  %vm559 = vcmp.ge.f32.partialorder %v558, %v110
  %v560 = vsel %vm547, %v536, %v526
  %v561 = vsel %vm553, %v539, %v560
  %v562 = vsel %vm559, %v541, %v561
  %v563 = vsub.s32 %v541, 1
  %v564 = vsub.s32 %v539, 1
  %v565 = vsub.s32 %v536, 1
  %v566 = vsel %vm547, %v564, %v565
  %v567 = vsel %vm553, %v563, %v566
  %v568 = vsel %vm559, %v532, %v567
  %v569 = vsub.s32 %v568, %v562
  %v570 = vadd.s32 %v569, 3
  %v571 = vshra.s32 %v570, 2
  %v572 = vadd.s32 %v562, %v571
  %v573 = vadd.s32 %v569, 1
  %v574 = vshra.s32 %v573, 1
  %v575 = vadd.s32 %v562, %v574
  %v576 = vshra.s32 %v569, 2
  %v577 = vsub.s32 %v568, %v576
  %vm578 = vcmp.ge.s32.totalorder %v112, %v572
  %v579 = vsel %vm578, 1, 0
  %v580 = vcvt.s32.f32 %v579
  %581 = vadd.xlane.f32.xlu0 %v580
  %v582 = vpop.xlane.xlu0 %581
  %vm583 = vcmp.ge.f32.partialorder %v582, %v110
  %vm584 = vcmp.ge.s32.totalorder %v112, %v575
  %v585 = vsel %vm584, 1, 0
  %v586 = vcvt.s32.f32 %v585
  %587 = vadd.xlane.f32.xlu0 %v586
  %v588 = vpop.xlane.xlu0 %587
  %vm589 = vcmp.ge.f32.partialorder %v588, %v110
  %vm590 = vcmp.ge.s32.totalorder %v112, %v577
  %v591 = vsel %vm590, 1, 0
  %v592 = vcvt.s32.f32 %v591
  %593 = vadd.xlane.f32.xlu0 %v592
  %v594 = vpop.xlane.xlu0 %593
  %vm595 = vcmp.ge.f32.partialorder %v594, %v110
  %v596 = vsel %vm583, %v572, %v562
  %v597 = vsel %vm589, %v575, %v596
  %v598 = vsel %vm595, %v577, %v597
  %v599 = vsub.s32 %v577, 1
  %v600 = vsub.s32 %v575, 1
  %v601 = vsub.s32 %v572, 1
  %v602 = vsel %vm583, %v600, %v601
  %v603 = vsel %vm589, %v599, %v602
  %v604 = vsel %vm595, %v568, %v603
  %v605 = vsub.s32 %v604, %v598
  %v606 = vadd.s32 %v605, 3
  %v607 = vshra.s32 %v606, 2
  %v608 = vadd.s32 %v598, %v607
  %v609 = vadd.s32 %v605, 1
  %v610 = vshra.s32 %v609, 1
  %v611 = vadd.s32 %v598, %v610
  %v612 = vshra.s32 %v605, 2
  %v613 = vsub.s32 %v604, %v612
  %vm614 = vcmp.ge.s32.totalorder %v112, %v608
  %v615 = vsel %vm614, 1, 0
  %v616 = vcvt.s32.f32 %v615
  %617 = vadd.xlane.f32.xlu0 %v616
  %v618 = vpop.xlane.xlu0 %617
  %vm619 = vcmp.ge.f32.partialorder %v618, %v110
  %vm620 = vcmp.ge.s32.totalorder %v112, %v611
  %v621 = vsel %vm620, 1, 0
  %v622 = vcvt.s32.f32 %v621
  %623 = vadd.xlane.f32.xlu0 %v622
  %v624 = vpop.xlane.xlu0 %623
  %vm625 = vcmp.ge.f32.partialorder %v624, %v110
  %vm626 = vcmp.ge.s32.totalorder %v112, %v613
  %v627 = vsel %vm626, 1, 0
  %v628 = vcvt.s32.f32 %v627
  %629 = vadd.xlane.f32.xlu0 %v628
  %v630 = vpop.xlane.xlu0 %629
  %vm631 = vcmp.ge.f32.partialorder %v630, %v110
  %v632 = vsel %vm619, %v608, %v598
  %v633 = vsel %vm625, %v611, %v632
  %v634 = vsel %vm631, %v613, %v633
  %v635 = vsub.s32 %v613, 1
  %v636 = vsub.s32 %v611, 1
  %v637 = vsub.s32 %v608, 1
  %v638 = vsel %vm619, %v636, %v637
  %v639 = vsel %vm625, %v635, %v638
  %v640 = vsel %vm631, %v604, %v639
  %v641 = vsub.s32 %v640, %v634
  %v642 = vadd.s32 %v641, 3
  %v643 = vshra.s32 %v642, 2
  %v644 = vadd.s32 %v634, %v643
  %v645 = vadd.s32 %v641, 1
  %v646 = vshra.s32 %v645, 1
  %v647 = vadd.s32 %v634, %v646
  %v648 = vshra.s32 %v641, 2
  %v649 = vsub.s32 %v640, %v648
  %vm650 = vcmp.ge.s32.totalorder %v112, %v644
  %v651 = vsel %vm650, 1, 0
  %v652 = vcvt.s32.f32 %v651
  %653 = vadd.xlane.f32.xlu0 %v652
  %v654 = vpop.xlane.xlu0 %653
  %vm655 = vcmp.ge.f32.partialorder %v654, %v110
  %vm656 = vcmp.ge.s32.totalorder %v112, %v647
  %v657 = vsel %vm656, 1, 0
  %v658 = vcvt.s32.f32 %v657
  %659 = vadd.xlane.f32.xlu0 %v658
  %v660 = vpop.xlane.xlu0 %659
  %vm661 = vcmp.ge.f32.partialorder %v660, %v110
  %vm662 = vcmp.ge.s32.totalorder %v112, %v649
  %v663 = vsel %vm662, 1, 0
  %v664 = vcvt.s32.f32 %v663
  %665 = vadd.xlane.f32.xlu0 %v664
  %v666 = vpop.xlane.xlu0 %665
  %vm667 = vcmp.ge.f32.partialorder %v666, %v110
  %v668 = vsel %vm655, %v644, %v634
  %v669 = vsel %vm661, %v647, %v668
  %v670 = vsel %vm667, %v649, %v669
  %v671 = vsub.s32 %v649, 1
  %v672 = vsub.s32 %v647, 1
  %v673 = vsub.s32 %v644, 1
  %v674 = vsel %vm655, %v672, %v673
  %v675 = vsel %vm661, %v671, %v674
  %v676 = vsel %vm667, %v640, %v675
  %v677 = vsub.s32 %v676, %v670
  %v678 = vadd.s32 %v677, 3
  %v679 = vshra.s32 %v678, 2
  %v680 = vadd.s32 %v670, %v679
  %v681 = vadd.s32 %v677, 1
  %v682 = vshra.s32 %v681, 1
  %v683 = vadd.s32 %v670, %v682
  %v684 = vshra.s32 %v677, 2
  %v685 = vsub.s32 %v676, %v684
  %vm686 = vcmp.ge.s32.totalorder %v112, %v680
  %v687 = vsel %vm686, 1, 0
  %v688 = vcvt.s32.f32 %v687
  %689 = vadd.xlane.f32.xlu0 %v688
  %v690 = vpop.xlane.xlu0 %689
  %vm691 = vcmp.ge.f32.partialorder %v690, %v110
  %vm692 = vcmp.ge.s32.totalorder %v112, %v683
  %v693 = vsel %vm692, 1, 0
  %v694 = vcvt.s32.f32 %v693
  %695 = vadd.xlane.f32.xlu0 %v694
  %v696 = vpop.xlane.xlu0 %695
  %vm697 = vcmp.ge.f32.partialorder %v696, %v110
  %vm698 = vcmp.ge.s32.totalorder %v112, %v685
  %v699 = vsel %vm698, 1, 0
  %v700 = vcvt.s32.f32 %v699
  %701 = vadd.xlane.f32.xlu0 %v700
  %v702 = vpop.xlane.xlu0 %701
  %vm703 = vcmp.ge.f32.partialorder %v702, %v110
  %v704 = vsel %vm691, %v680, %v670
  %v705 = vsel %vm697, %v683, %v704
  %v706 = vsel %vm703, %v685, %v705
  %vm707 = vcmp.gt.s32.totalorder %v112, %v706
  %vm708 = vcmp.eq.s32.totalorder %v112, %v706
  %v709 = vsel %vm707, 1, 0
  %v710 = vcvt.s32.f32 %v709
  %711 = vadd.xlane.f32.xlu0 %v710
  %v712 = vpop.xlane.xlu0 %711
  %v713 = vsub.f32 %v110, %v712
  %v714 = vsel %vm708, %v35, 128
  %vm715 = vcmp.lt.s32.totalorder %v714, 32
  %v716 = vsel %vm715, 1, 0
  %v717 = vcvt.s32.f32 %v716
  %718 = vadd.xlane.f32.xlu0 %v717
  %v719 = vpop.xlane.xlu0 %718
  %vm720 = vcmp.ge.f32.partialorder %v719, %v713
  %vm721 = vcmp.lt.s32.totalorder %v714, 64
  %v722 = vsel %vm721, 1, 0
  %v723 = vcvt.s32.f32 %v722
  %724 = vadd.xlane.f32.xlu0 %v723
  %v725 = vpop.xlane.xlu0 %724
  %vm726 = vcmp.ge.f32.partialorder %v725, %v713
  %vm727 = vcmp.lt.s32.totalorder %v714, 96
  %v728 = vsel %vm727, 1, 0
  %v729 = vcvt.s32.f32 %v728
  %730 = vadd.xlane.f32.xlu0 %v729
  %v731 = vpop.xlane.xlu0 %730
  %vm732 = vcmp.ge.f32.partialorder %v731, %v713
  %v733 = vsel %vm732, 96, 128
  %v734 = vsel %vm726, 64, %v733
  %v735 = vsel %vm720, 32, %v734
  %v736 = vsel %vm732, 65, 97
  %v737 = vsel %vm726, 33, %v736
  %v738 = vsel %vm720, 0, %v737
  %v739 = vsub.s32 %v735, %v738
  %v740 = vshra.s32 %v739, 2
  %v741 = vadd.s32 %v738, %v740
  %v742 = vshra.s32 %v739, 1
  %v743 = vadd.s32 %v738, %v742
  %v744 = vadd.s32 %v739, 3
  %v745 = vshra.s32 %v744, 2
  %v746 = vsub.s32 %v735, %v745
  %vm747 = vcmp.lt.s32.totalorder %v714, %v741
  %v748 = vsel %vm747, 1, 0
  %v749 = vcvt.s32.f32 %v748
  %750 = vadd.xlane.f32.xlu0 %v749
  %v751 = vpop.xlane.xlu0 %750
  %vm752 = vcmp.ge.f32.partialorder %v751, %v713
  %vm753 = vcmp.lt.s32.totalorder %v714, %v743
  %v754 = vsel %vm753, 1, 0
  %v755 = vcvt.s32.f32 %v754
  %756 = vadd.xlane.f32.xlu0 %v755
  %v757 = vpop.xlane.xlu0 %756
  %vm758 = vcmp.ge.f32.partialorder %v757, %v713
  %vm759 = vcmp.lt.s32.totalorder %v714, %v746
  %v760 = vsel %vm759, 1, 0
  %v761 = vcvt.s32.f32 %v760
  %762 = vadd.xlane.f32.xlu0 %v761
  %v763 = vpop.xlane.xlu0 %762
  %vm764 = vcmp.ge.f32.partialorder %v763, %v713
  %v765 = vsel %vm764, %v746, %v735
  %v766 = vsel %vm758, %v743, %v765
  %v767 = vsel %vm752, %v741, %v766
  %v768 = vadd.s32 %v741, 1
  %v769 = vadd.s32 %v743, 1
  %v770 = vadd.s32 %v746, 1
  %v771 = vsel %vm764, %v769, %v770
  %v772 = vsel %vm758, %v768, %v771
  %v773 = vsel %vm752, %v738, %v772
  %v774 = vsub.s32 %v767, %v773
  %v775 = vshra.s32 %v774, 2
  %v776 = vadd.s32 %v773, %v775
  %v777 = vshra.s32 %v774, 1
  %v778 = vadd.s32 %v773, %v777
  %v779 = vadd.s32 %v774, 3
  %v780 = vshra.s32 %v779, 2
  %v781 = vsub.s32 %v767, %v780
  %vm782 = vcmp.lt.s32.totalorder %v714, %v776
  %v783 = vsel %vm782, 1, 0
  %v784 = vcvt.s32.f32 %v783
  %785 = vadd.xlane.f32.xlu0 %v784
  %v786 = vpop.xlane.xlu0 %785
  %vm787 = vcmp.ge.f32.partialorder %v786, %v713
  %vm788 = vcmp.lt.s32.totalorder %v714, %v778
  %v789 = vsel %vm788, 1, 0
  %v790 = vcvt.s32.f32 %v789
  %791 = vadd.xlane.f32.xlu0 %v790
  %v792 = vpop.xlane.xlu0 %791
  %vm793 = vcmp.ge.f32.partialorder %v792, %v713
  %vm794 = vcmp.lt.s32.totalorder %v714, %v781
  %v795 = vsel %vm794, 1, 0
  %v796 = vcvt.s32.f32 %v795
  %797 = vadd.xlane.f32.xlu0 %v796
  %v798 = vpop.xlane.xlu0 %797
  %vm799 = vcmp.ge.f32.partialorder %v798, %v713
  %v800 = vsel %vm799, %v781, %v767
  %v801 = vsel %vm793, %v778, %v800
  %v802 = vsel %vm787, %v776, %v801
  %v803 = vadd.s32 %v776, 1
  %v804 = vadd.s32 %v778, 1
  %v805 = vadd.s32 %v781, 1
  %v806 = vsel %vm799, %v804, %v805
  %v807 = vsel %vm793, %v803, %v806
  %v808 = vsel %vm787, %v773, %v807
  %v809 = vsub.s32 %v802, %v808
  %v810 = vshra.s32 %v809, 2
  %v811 = vadd.s32 %v808, %v810
  %v812 = vshra.s32 %v809, 1
  %v813 = vadd.s32 %v808, %v812
  %v814 = vadd.s32 %v809, 3
  %v815 = vshra.s32 %v814, 2
  %v816 = vsub.s32 %v802, %v815
  %vm817 = vcmp.lt.s32.totalorder %v714, %v811
  %v818 = vsel %vm817, 1, 0
  %v819 = vcvt.s32.f32 %v818
  %820 = vadd.xlane.f32.xlu0 %v819
  %v821 = vpop.xlane.xlu0 %820
  %vm822 = vcmp.ge.f32.partialorder %v821, %v713
  %vm823 = vcmp.lt.s32.totalorder %v714, %v813
  %v824 = vsel %vm823, 1, 0
  %v825 = vcvt.s32.f32 %v824
  %826 = vadd.xlane.f32.xlu0 %v825
  %v827 = vpop.xlane.xlu0 %826
  %vm828 = vcmp.ge.f32.partialorder %v827, %v713
  %vm829 = vcmp.lt.s32.totalorder %v714, %v816
  %v830 = vsel %vm829, 1, 0
  %v831 = vcvt.s32.f32 %v830
  %832 = vadd.xlane.f32.xlu0 %v831
  %v833 = vpop.xlane.xlu0 %832
  %vm834 = vcmp.ge.f32.partialorder %v833, %v713
  %v835 = vsel %vm834, %v816, %v802
  %v836 = vsel %vm828, %v813, %v835
  %v837 = vsel %vm822, %v811, %v836
  %v838 = vadd.s32 %v811, 1
  %v839 = vadd.s32 %v813, 1
  %v840 = vadd.s32 %v816, 1
  %v841 = vsel %vm834, %v839, %v840
  %v842 = vsel %vm828, %v838, %v841
  %v843 = vsel %vm822, %v808, %v842
  %v844 = vsub.s32 %v837, %v843
  %v845 = vshra.s32 %v844, 2
  %v846 = vadd.s32 %v843, %v845
  %v847 = vshra.s32 %v844, 1
  %v848 = vadd.s32 %v843, %v847
  %v849 = vadd.s32 %v844, 3
  %v850 = vshra.s32 %v849, 2
  %v851 = vsub.s32 %v837, %v850
  %vm852 = vcmp.lt.s32.totalorder %v714, %v846
  %v853 = vsel %vm852, 1, 0
  %v854 = vcvt.s32.f32 %v853
  %855 = vadd.xlane.f32.xlu0 %v854
  %v856 = vpop.xlane.xlu0 %855
  %vm857 = vcmp.ge.f32.partialorder %v856, %v713
  %vm858 = vcmp.lt.s32.totalorder %v714, %v848
  %v859 = vsel %vm858, 1, 0
  %v860 = vcvt.s32.f32 %v859
  %861 = vadd.xlane.f32.xlu0 %v860
  %v862 = vpop.xlane.xlu0 %861
  %vm863 = vcmp.ge.f32.partialorder %v862, %v713
  %vm864 = vcmp.lt.s32.totalorder %v714, %v851
  %v865 = vsel %vm864, 1, 0
  %v866 = vcvt.s32.f32 %v865
  %867 = vadd.xlane.f32.xlu0 %v866
  %v868 = vpop.xlane.xlu0 %867
  %vm869 = vcmp.ge.f32.partialorder %v868, %v713
  %v870 = vsel %vm869, %v851, %v837
  %v871 = vsel %vm863, %v848, %v870
  %v872 = vsel %vm857, %v846, %v871
  %vm873 = vmor %vm36, %vm707
  %vm874 = vcmp.lt.s32.totalorder %v35, %v872
  %vm875 = vmand %vm708, %vm874
  %vm876 = vmor %vm873, %vm875
  %v877 = vsel %vm876, %v106, 0.0
  %878 = vadd.xlane.f32.xlu0 %v877
  %v879 = vpop.xlane.xlu0 %878
  %v880 = vrot.slane %v879, 4
  %v881 = vadd.f32 %v879, %v880
  %v882 = vrot.slane %v881, 2
  %v883 = vadd.f32 %v881, %v882
  %v884 = vrot.slane %v883, 1
  %v885 = vadd.f32 %v883, %v884
  %s886 = vtos %v885
  %v887 = vsub.f32 %v25, %v29
  %v888 = vsub.f32 %v26, %v30
  %v889 = vsub.f32 %v27, %v31
  %v890 = vsub.f32 %v28, %v32
  %v891 = vand.u32 2147483647, %v887
  %v892 = vand.u32 2147483647, %v888
  %v893 = vand.u32 2147483647, %v889
  %v894 = vand.u32 2147483647, %v890
  %vm895 = vcmp.lt.f32.partialorder %v891, 1.0
  %vm896 = vcmp.lt.f32.partialorder %v892, 1.0
  %vm897 = vcmp.lt.f32.partialorder %v893, 1.0
  %vm898 = vcmp.lt.f32.partialorder %v894, 1.0
  %v899 = vmul.f32 %v891, -2.0
  %v900 = vmul.f32 %v892, -2.0
  %v901 = vmul.f32 %v893, -2.0
  %v902 = vmul.f32 %v894, -2.0
  %v903 = vmul.f32 %v899, 1.442695
  %v904 = vpow.pop %v903
  %v905 = vmul.f32 %v900, 1.442695
  %v906 = vpow.pop %v905
  %v907 = vmul.f32 %v901, 1.442695
  %v908 = vpow.pop %v907
  %v909 = vmul.f32 %v902, 1.442695
  %v910 = vpow.pop %v909
  %v911 = vsub.f32 %v904, 1.0
  %v912 = vsub.f32 %v906, 1.0
  %v913 = vsub.f32 %v908, 1.0
  %v914 = vsub.f32 %v910, 1.0
  %v915 = vmul.f32 %v911, 0.5
  %v916 = vmul.f32 %v912, 0.5
  %v917 = vmul.f32 %v913, 0.5
  %v918 = vmul.f32 %v914, 0.5
  %v919 = vadd.f32 %v891, %v915
  %v920 = vadd.f32 %v892, %v916
  %v921 = vadd.f32 %v893, %v917
  %v922 = vadd.f32 %v894, %v918
  %v923 = vmul.f32 %v919, 1.1565176
  %v924 = vmul.f32 %v920, 1.1565176
  %v925 = vmul.f32 %v921, 1.1565176
  %v926 = vmul.f32 %v922, 1.1565176
  %v927 = vadd.f32 %v891, -0.34348235
  %v928 = vadd.f32 %v892, -0.34348235
  %v929 = vadd.f32 %v893, -0.34348235
  %v930 = vadd.f32 %v894, -0.34348235
  %v931 = vsel %vm895, %v923, %v927
  %v932 = vsel %vm896, %v924, %v928
  %v933 = vsel %vm897, %v925, %v929
  %v934 = vsel %vm898, %v926, %v930
  %v935 = vmul.f32 %v931, %v39
  %v936 = vmul.f32 %v932, %v39
  %v937 = vmul.f32 %v933, %v39
  %v938 = vmul.f32 %v934, %v39
  %v939 = vadd.f32 %v935, %v936
  %v940 = vadd.f32 %v939, %v937
  %v941 = vadd.f32 %v940, %v938
  %942 = vadd.xlane.f32.xlu0 %v941
  %v943 = vpop.xlane.xlu0 %942
  %v944 = vrot.slane %v943, 4
  %v945 = vadd.f32 %v943, %v944
  %v946 = vrot.slane %v945, 2
  %v947 = vadd.f32 %v945, %v946
  %v948 = vrot.slane %v947, 1
  %v949 = vadd.f32 %v947, %v948
  %s950 = vtos %v949
  %v951 = vrot.slane %v108, 4
  %v952 = vadd.f32 %v108, %v951
  %v953 = vrot.slane %v952, 2
  %v954 = vadd.f32 %v952, %v953
  %v955 = vrot.slane %v954, 1
  %v956 = vadd.f32 %v954, %v955
  %s957 = vtos %v956
  %v958 = vlaneseq
  %v959 = vshrl.u32 %v958, 7
  %vm960 = vcmp.eq.s32.totalorder %v959, 0
  %v961 = vstv %s886
  %v962 = vsel %vm960, %v961, 0.0
  %vm963 = vcmp.eq.s32.totalorder %v959, 1
  %v964 = vstv %s950
  %v965 = vsel %vm963, %v964, 0.0
  %v966 = vadd.f32 %v962, %v965
  %vm967 = vcmp.eq.s32.totalorder %v959, 2
  %v968 = vstv %s957
  %v969 = vsel %vm967, %v968, 0.0
  %v970 = vadd.f32 %v966, %v969
  %971 = vst [vmem:[%s4] sm:$0xff] %v970
  // Predicated region
  $region18: #{_multibox_loss_forward.1} parent=0 // pred_check
    _
  $region19: #{_multibox_loss_forward.1} parent=0 // pred_check_branch
    %973 = sbr.rel (0) target = $region21
  $region20: #{_multibox_loss_forward.1} parent=0 // pred_region
    _
  $region21: #{_multibox_loss_forward.1} parent=0 // pred_fallthru
    _
  // Predicated region
  $region22: #{_multibox_loss_forward.1} parent=0 // pred_check
    _
  $region23: #{_multibox_loss_forward.1} parent=0 // pred_check_branch
    %975 = sbr.rel (0) target = $region25
  $region24: #{_multibox_loss_forward.1} parent=0 // pred_region
    _
  $region25: #{_multibox_loss_forward.1} parent=0 // pred_fallthru
    _

</llo_original>
